<compile_context>
chip_gen: v7x
topology: tpu7x:2x2x1
jax: 0.10.0
libtpu: 0.0.40
codegen_flags: <defaults>
</compile_context>

<pallas_src>
from functools import partial

import jax
import jax.numpy as jnp
from jax import lax
from jax.experimental import pallas as pl
from jax.experimental.pallas import tpu as pltpu

# ---- synthetic model config (small shapes) ----
B, S = 2, 8
VOCAB = 128
H = 32
N_HEADS = 4
HEAD_DIM = H // N_HEADS
INTER = 64
N_LAYERS = 2
RMS_EPS = 1e-6


# ---------------- fused whole-model Pallas kernel ----------------

def _e5_forward_kernel(pool_idx_ref,                      # scalar prefetch (SMEM)
                       emb_ref, bias_ref, rope_ref, lnf_ref,
                       ln_ref, wqkv_ref, wo_ref, wgu_ref, wd_ref,
                       out_ref,
                       x_sc):
    """grid = (layer, batch); x_sc (B,S,H) keeps activations resident across layers."""
    # All grid-position / scalar reads at TOP LEVEL (never inside pl.when bodies).
    layer = pl.program_id(0)
    batch = pl.program_id(1)
    n_layers = pl.num_programs(0)
    pool_idx = pool_idx_ref[batch]                        # last-token pool index

    @pl.when(layer == 0)
    def _init():
        x_sc[batch] = emb_ref[batch]

    def rms_norm(x, w):                                   # x (R,H) f32, w (1,H)/(H,)
        var = jnp.mean(x * x, axis=-1, keepdims=True)
        return x * lax.rsqrt(var + RMS_EPS) * w

    def bf16_dot(a, b):                                   # MXU: bf16 in, f32 acc
        return jnp.dot(a.astype(jnp.bfloat16), b.astype(jnp.bfloat16),
                       preferred_element_type=jnp.float32)

    def split_heads(z):                                   # (S, NH*D) -> (NH, S, D)
        return jnp.stack(
            [z[:, h * HEAD_DIM:(h + 1) * HEAD_DIM] for h in range(N_HEADS)], axis=0)

    def rope(z, cos, sin):                                # z (NH,S,D); rotate-half w/o MXU
        half = HEAD_DIM // 2
        z1, z2 = z[..., :half], z[..., half:]
        rot = jnp.concatenate([-z2, z1], axis=-1)
        return z * cos + rot * sin

    x = x_sc[batch]                                       # (S, H) f32
    lw = ln_ref[0]                                        # (2, H): [0]=ln1, [1]=ln2
    cos = rope_ref[0][None]                               # (1, S, D)
    sin = rope_ref[1][None]
    bias = bias_ref[batch]                                # (S, S) additive causal+pad mask
    nhd = N_HEADS * HEAD_DIM
    scale = 1.0 / (HEAD_DIM ** 0.5)

    # ---- attention: pre-norm -> fused QKV matmul -> head-batched attention ->
    #      fused output projection, residual fused ----
    hn = rms_norm(x, lw[0:1]).astype(jnp.bfloat16)        # (S, H) bf16 (no extra casts)
    qkv = jnp.dot(hn, wqkv_ref[0],
                  preferred_element_type=jnp.float32)     # (S, 3*NH*D): ONE MXU matmul
    q = rope(split_heads(qkv[:, :nhd]), cos, sin) * scale # (NH, S, D)
    k = rope(split_heads(qkv[:, nhd:2 * nhd]), cos, sin)
    v = split_heads(qkv[:, 2 * nhd:])

    # heads as the dot_general batch dim (flash-attention style einsums)
    s = jnp.einsum('nsd,ntd->nst', q.astype(jnp.bfloat16), k.astype(jnp.bfloat16),
                   preferred_element_type=jnp.float32)    # (NH, S, S)
    s = s + bias[None]                                    # precomputed mask, no iota here
    s = s - jnp.max(s, axis=-1, keepdims=True)
    p = jnp.exp(s)
    p = p / jnp.sum(p, axis=-1, keepdims=True)            # TODO(synk): pl.reciprocal(approx=True) on HW
    ctx = jnp.einsum('nst,ntd->nsd', p.astype(jnp.bfloat16), v.astype(jnp.bfloat16),
                     preferred_element_type=jnp.float32)  # (NH, S, D)
    ctx2 = jnp.concatenate([ctx[h] for h in range(N_HEADS)], axis=-1)  # (S, NH*D)
    x = x + bf16_dot(ctx2, wo_ref[0])                     # ONE output-proj matmul, fused residual

    # ---- MLP: pre-norm -> fused gate|up matmul (lane-dense 128) -> SwiGLU -> down ----
    hn2 = rms_norm(x, lw[1:2]).astype(jnp.bfloat16)
    gu = jnp.dot(hn2, wgu_ref[0],
                 preferred_element_type=jnp.float32)      # (S, 2*INTER)
    g, u = gu[:, :INTER], gu[:, INTER:]
    mid = (g * jax.nn.sigmoid(g)) * u                     # silu(gate)*up, f32 on VPU/EUP
    x = x + bf16_dot(mid, wd_ref[0])
    x_sc[batch] = x

    # ---- last layer: pool FIRST (one row), then final RMSNorm + L2 normalize ----
    @pl.when(layer == n_layers - 1)
    def _finalize():
        row = x_sc[batch, pl.ds(pool_idx, 1), :]          # (1, H) dynamic row slice
        hf = rms_norm(row, lnf_ref[...])                  # norm only the pooled row
        inv = lax.rsqrt(jnp.maximum(jnp.sum(hf * hf, axis=-1, keepdims=True), 1e-24))
        out_ref[pl.ds(batch, 1), :] = (hf * inv).astype(out_ref.dtype)


# ---------------- plain-JAX glue ----------------

def _rope_tables(seq_len, head_dim):
    """stacked (2, S, D) cos/sin tables (HF rotate-half convention)."""
    half = head_dim // 2
    inv_freq = 1.0 / (10000.0 ** (jnp.arange(half, dtype=jnp.float32) / half))
    ang = jnp.arange(seq_len, dtype=jnp.float32)[:, None] * inv_freq[None, :]
    cos = jnp.concatenate([jnp.cos(ang), jnp.cos(ang)], axis=-1)   # (S, D)
    sin = jnp.concatenate([jnp.sin(ang), jnp.sin(ang)], axis=-1)
    return jnp.stack([cos, sin], axis=0)


def e5_mistral_forward(params, input_ids, attention_mask):
    emb = params["embed"][input_ids].astype(jnp.float32)  # (B, S, H) embedding gather (glue)
    b, s, h = emb.shape
    mask = attention_mask.astype(jnp.int32)

    # last-token pool index, exact semantics of E5MistralModelWrapper._last_token_pool
    left_padding = jnp.sum(mask[:, -1]) == b
    seq_len = jnp.sum(mask, axis=1) - 1
    pool_idx = jnp.where(left_padding, s - 1, seq_len).astype(jnp.int32)

    # additive causal + padding bias, computed ONCE on the host (no per-step iota)
    causal = jnp.tril(jnp.ones((s, s), jnp.bool_))
    allowed = causal[None, :, :] & (mask[:, None, :] > 0)
    attn_bias = jnp.where(allowed, 0.0, -1e30).astype(jnp.float32)  # (B, S, S)

    rope_tab = _rope_tables(s, HEAD_DIM)                  # (2, S, D)
    n_layers = params["wqkv"].shape[0]

    grid_spec = pltpu.PrefetchScalarGridSpec(
        num_scalar_prefetch=1,
        grid=(n_layers, b),                               # layer OUTER, batch INNER
        in_specs=[
            # resident inputs (constant block index -> fetched once per forward)
            pl.BlockSpec((b, s, h), lambda li, bi, *_: (0, 0, 0)),          # embeddings
            pl.BlockSpec((b, s, s), lambda li, bi, *_: (0, 0, 0)),          # attn bias
            pl.BlockSpec((2, s, HEAD_DIM), lambda li, bi, *_: (0, 0, 0)),   # cos|sin
            pl.BlockSpec((1, h), lambda li, bi, *_: (0, 0)),                # final norm
            # per-layer weights (index depends only on the layer axis ->
            # each layer's weights are DMA'd exactly once per forward)
            pl.BlockSpec((1, 2, h), lambda li, bi, *_: (li, 0, 0)),         # ln1|ln2
            pl.BlockSpec((1, h, 3 * h), lambda li, bi, *_: (li, 0, 0)),     # fused QKV
            pl.BlockSpec((1, h, h), lambda li, bi, *_: (li, 0, 0)),         # out proj
            pl.BlockSpec((1, h, 2 * INTER), lambda li, bi, *_: (li, 0, 0)), # gate|up
            pl.BlockSpec((1, INTER, h), lambda li, bi, *_: (li, 0, 0)),     # down
        ],
        # constant block index -> output stays resident, written back to HBM once
        out_specs=pl.BlockSpec((b, h), lambda li, bi, *_: (0, 0)),
        scratch_shapes=[pltpu.VMEM((b, s, h), jnp.float32)],   # resident activations
    )
    out = pl.pallas_call(
        _e5_forward_kernel,
        out_shape=jax.ShapeDtypeStruct((b, h), jnp.float32),
        grid_spec=grid_spec,
        # layer axis carries the recurrence; batch kept "arbitrary" so megacore
        # does not duplicate the (dominant) weight HBM traffic per core.
        compiler_params=pltpu.CompilerParams(
            dimension_semantics=("arbitrary", "arbitrary")),
    )(pool_idx, emb, attn_bias, rope_tab,
      params["ln_f"], params["ln"],
      params["wqkv"], params["wo"], params["wgu"], params["wd"])
    return out


def init_params(key):
    ks = jax.random.split(key, 5)
    scale = 0.02

    def w(k, shape):  # bf16 MXU operands
        return (jax.random.normal(k, shape, jnp.float32) * scale).astype(jnp.bfloat16)

    return {
        "embed": jax.random.normal(ks[0], (VOCAB, H), jnp.float32) * scale,
        "ln_f": jnp.ones((1, H), jnp.float32),
        "ln":   jnp.ones((N_LAYERS, 2, H), jnp.float32),           # [l,0]=ln1, [l,1]=ln2
        # fused QKV: columns [0:H]=Q heads, [H:2H]=K heads, [2H:3H]=V heads
        "wqkv": w(ks[1], (N_LAYERS, H, 3 * H)),
        "wo":   w(ks[2], (N_LAYERS, H, H)),                         # (NH*D, H)
        # fused gate|up: columns [0:INTER]=gate, [INTER:2*INTER]=up (lane-dense 128)
        "wgu":  w(ks[3], (N_LAYERS, H, 2 * INTER)),
        "wd":   w(ks[4], (N_LAYERS, INTER, H)),
    }


if __name__ == "__main__":
    root = jax.random.PRNGKey(0)
    pkey, ikey = jax.random.split(root)
    params = init_params(pkey)
    input_ids = jax.random.randint(ikey, (B, S), 0, VOCAB, dtype=jnp.int32)
    # right-padded batch (exercises the gather branch of _last_token_pool):
    attention_mask = jnp.array(
        [[1] * S, [1] * 5 + [0] * (S - 5)], dtype=jnp.int32)

    out = jax.jit(e5_mistral_forward)(params, input_ids, attention_mask)
    out = jax.block_until_ready(out)
    assert out.shape == (B, H)
    assert bool(jnp.all(jnp.isfinite(out)))
    norms = jnp.linalg.norm(out, axis=-1)
    assert bool(jnp.all(jnp.abs(norms - 1.0) < 1e-3))   # unit-norm embeddings
    print("KERNEL_OK")
</pallas_src>

<mosaic_0001>
module attributes {stable_mosaic.version = 11 : i64} {
  func.func @_e5_forward_kernel(%arg0: i32, %arg1: i32, %arg2: memref<2xi32, #tpu.memory_space<smem>>, %arg3: memref<2x8x32xf32, #tpu.memory_space<vmem>>, %arg4: memref<2x8x8xf32, #tpu.memory_space<vmem>>, %arg5: memref<2x8x8xf32, #tpu.memory_space<vmem>>, %arg6: memref<1x32xf32, #tpu.memory_space<vmem>>, %arg7: memref<1x2x32xf32, #tpu.memory_space<vmem>>, %arg8: memref<1x32x96xbf16, #tpu.memory_space<vmem>>, %arg9: memref<1x32x32xbf16, #tpu.memory_space<vmem>>, %arg10: memref<1x32x128xbf16, #tpu.memory_space<vmem>>, %arg11: memref<1x64x32xbf16, #tpu.memory_space<vmem>>, %arg12: memref<2x32xf32, #tpu.memory_space<vmem>>, %arg13: memref<2x8x32xf32, #tpu.memory_space<vmem>>) attributes {dimension_semantics = [#tpu.dimension_semantics<arbitrary>, #tpu.dimension_semantics<arbitrary>], iteration_bounds = array<i64: 2, 2>, scalar_prefetch = 1 : i64, scratch_operands = 1 : i64, tpu.core_type = #tpu.core_type<tc>, window_params = [{pipeline_mode = #tpu.pipeline_mode<synchronous>, transform_indices = @transform_0, window_bounds = array<i64: 2, 8, 32>}, {pipeline_mode = #tpu.pipeline_mode<synchronous>, transform_indices = @transform_1, window_bounds = array<i64: 2, 8, 8>}, {pipeline_mode = #tpu.pipeline_mode<synchronous>, transform_indices = @transform_2, window_bounds = array<i64: 2, 8, 8>}, {pipeline_mode = #tpu.pipeline_mode<synchronous>, transform_indices = @transform_3, window_bounds = array<i64: 1, 32>}, {transform_indices = @transform_4, window_bounds = array<i64: 1, 2, 32>}, {transform_indices = @transform_5, window_bounds = array<i64: 1, 32, 96>}, {transform_indices = @transform_6, window_bounds = array<i64: 1, 32, 32>}, {transform_indices = @transform_7, window_bounds = array<i64: 1, 32, 128>}, {transform_indices = @transform_8, window_bounds = array<i64: 1, 64, 32>}, {pipeline_mode = #tpu.pipeline_mode<synchronous>, transform_indices = @transform_9, window_bounds = array<i64: 2, 32>}]} {
    %0 = arith.index_cast %arg1 : i32 to index
    %1 = memref.load %arg2[%0] : memref<2xi32, #tpu.memory_space<smem>>
    %c0_i32 = arith.constant 0 : i32
    %2 = arith.cmpi eq, %arg0, %c0_i32 : i32
    %3 = arith.extui %2 : i1 to i32
    %c0_i32_0 = arith.constant 0 : i32
    %4 = arith.cmpi ne, %3, %c0_i32_0 : i32
    scf.if %4 {
      %158 = arith.index_cast %arg1 : i32 to index
      %c0_44 = arith.constant 0 : index
      %c0_45 = arith.constant 0 : index
      %159 = vector.load %arg3[%158, %c0_44, %c0_45] : memref<2x8x32xf32, #tpu.memory_space<vmem>>, vector<1x8x32xf32>
      %160 = vector.shape_cast %159 : vector<1x8x32xf32> to vector<8x32xf32>
      %161 = arith.index_cast %arg1 : i32 to index
      %c0_46 = arith.constant 0 : index
      %c0_47 = arith.constant 0 : index
      %162 = vector.load %arg13[%161, %c0_46, %c0_47] : memref<2x8x32xf32, #tpu.memory_space<vmem>>, vector<1x8x32xf32>
      %163 = vector.shape_cast %162 : vector<1x8x32xf32> to vector<8x32xf32>
      %164 = vector.shape_cast %160 : vector<8x32xf32> to vector<1x8x32xf32>
      tpu.vector_store %arg13[%161, %c0_46, %c0_47], %164 {strides = array<i32>} : memref<2x8x32xf32, #tpu.memory_space<vmem>>, vector<1x8x32xf32>,
    } else {
    }
    %5 = arith.index_cast %arg1 : i32 to index
    %c0 = arith.constant 0 : index
    %c0_1 = arith.constant 0 : index
    %6 = vector.load %arg13[%5, %c0, %c0_1] : memref<2x8x32xf32, #tpu.memory_space<vmem>>, vector<1x8x32xf32>
    %7 = vector.shape_cast %6 : vector<1x8x32xf32> to vector<8x32xf32>
    %c0_2 = arith.constant 0 : index
    %c0_3 = arith.constant 0 : index
    %c0_4 = arith.constant 0 : index
    %8 = vector.load %arg7[%c0_2, %c0_3, %c0_4] : memref<1x2x32xf32, #tpu.memory_space<vmem>>, vector<1x2x32xf32>
    %9 = vector.shape_cast %8 : vector<1x2x32xf32> to vector<2x32xf32>
    %c0_5 = arith.constant 0 : index
    %c0_6 = arith.constant 0 : index
    %c0_7 = arith.constant 0 : index
    %10 = vector.load %arg5[%c0_5, %c0_6, %c0_7] : memref<2x8x8xf32, #tpu.memory_space<vmem>>, vector<1x8x8xf32>
    %11 = vector.shape_cast %10 : vector<1x8x8xf32> to vector<8x8xf32>
    %12 = vector.shape_cast %11 : vector<8x8xf32> to vector<1x8x8xf32>
    %c1 = arith.constant 1 : index
    %c0_8 = arith.constant 0 : index
    %c0_9 = arith.constant 0 : index
    %13 = vector.load %arg5[%c1, %c0_8, %c0_9] : memref<2x8x8xf32, #tpu.memory_space<vmem>>, vector<1x8x8xf32>
    %14 = vector.shape_cast %13 : vector<1x8x8xf32> to vector<8x8xf32>
    %15 = vector.shape_cast %14 : vector<8x8xf32> to vector<1x8x8xf32>
    %16 = arith.index_cast %arg1 : i32 to index
    %c0_10 = arith.constant 0 : index
    %c0_11 = arith.constant 0 : index
    %17 = vector.load %arg4[%16, %c0_10, %c0_11] : memref<2x8x8xf32, #tpu.memory_space<vmem>>, vector<1x8x8xf32>
    %18 = vector.shape_cast %17 : vector<1x8x8xf32> to vector<8x8xf32>
    %19 = vector.extract_strided_slice %9 {offsets = [0, 0], sizes = [1, 32], strides = [1, 1]} : vector<2x32xf32> to vector<1x32xf32>
    %20 = arith.mulf %7, %7 : vector<8x32xf32>
    %cst = arith.constant dense<0.000000e+00> : vector<8xf32>
    %21 = vector.multi_reduction <add>, %20, %cst [1] : vector<8x32xf32> to vector<8xf32>
    %22 = vector.shape_cast %21 : vector<8xf32> to vector<8x1xf32>
    %cst_12 = arith.constant 3.200000e+01 : f32
    %23 = vector.broadcast %cst_12 : f32 to vector<8x1xf32>
    %24 = arith.divf %22, %23 : vector<8x1xf32>
    %cst_13 = arith.constant 9.99999997E-7 : f32
    %25 = vector.broadcast %cst_13 : f32 to vector<8x1xf32>
    %26 = arith.addf %24, %25 : vector<8x1xf32>
    %27 = math.rsqrt %26 : vector<8x1xf32>
    %28 = vector.broadcast %27 : vector<8x1xf32> to vector<8x32xf32>
    %29 = arith.mulf %7, %28 : vector<8x32xf32>
    %30 = vector.broadcast %19 : vector<1x32xf32> to vector<8x32xf32>
    %31 = arith.mulf %29, %30 : vector<8x32xf32>
    %32 = arith.truncf %31 : vector<8x32xf32> to vector<8x32xbf16>
    %c0_14 = arith.constant 0 : index
    %c0_15 = arith.constant 0 : index
    %c0_16 = arith.constant 0 : index
    %33 = vector.load %arg8[%c0_14, %c0_15, %c0_16] : memref<1x32x96xbf16, #tpu.memory_space<vmem>>, vector<1x32x96xbf16>
    %34 = vector.shape_cast %33 : vector<1x32x96xbf16> to vector<32x96xbf16>
    %cst_17 = arith.constant dense<0.000000e+00> : vector<8x96xf32>
    %35 = tpu.matmul %32, %34, %cst_17 {dimension_numbers = #tpu.dot_dimension_numbers<[1], [0], [0], [1], [0, 0, 1, 1], [], []>} : vector<8x32xbf16>, vector<32x96xbf16>, vector<8x96xf32> -> vector<8x96xf32>
    %36 = vector.extract_strided_slice %35 {offsets = [0, 0], sizes = [8, 32], strides = [1, 1]} : vector<8x96xf32> to vector<8x32xf32>
    %37 = vector.extract_strided_slice %36 {offsets = [0, 0], sizes = [8, 8], strides = [1, 1]} : vector<8x32xf32> to vector<8x8xf32>
    %38 = vector.extract_strided_slice %36 {offsets = [0, 8], sizes = [8, 8], strides = [1, 1]} : vector<8x32xf32> to vector<8x8xf32>
    %39 = vector.extract_strided_slice %36 {offsets = [0, 16], sizes = [8, 8], strides = [1, 1]} : vector<8x32xf32> to vector<8x8xf32>
    %40 = vector.extract_strided_slice %36 {offsets = [0, 24], sizes = [8, 8], strides = [1, 1]} : vector<8x32xf32> to vector<8x8xf32>
    %41 = vector.shape_cast %37 : vector<8x8xf32> to vector<1x8x8xf32>
    %42 = vector.shape_cast %38 : vector<8x8xf32> to vector<1x8x8xf32>
    %43 = vector.shape_cast %39 : vector<8x8xf32> to vector<1x8x8xf32>
    %44 = vector.shape_cast %40 : vector<8x8xf32> to vector<1x8x8xf32>
    %45 = tpu.concatenate %41, %42, %43, %44 in 0 : vector<1x8x8xf32>, vector<1x8x8xf32>, vector<1x8x8xf32>, vector<1x8x8xf32> -> vector<4x8x8xf32>
    %46 = vector.extract_strided_slice %45 {offsets = [0, 0, 0], sizes = [4, 8, 4], strides = [1, 1, 1]} : vector<4x8x8xf32> to vector<4x8x4xf32>
    %47 = vector.extract_strided_slice %45 {offsets = [0, 0, 4], sizes = [4, 8, 4], strides = [1, 1, 1]} : vector<4x8x8xf32> to vector<4x8x4xf32>
    %cst_18 = arith.constant 0.000000e+00 : f32
    %48 = vector.broadcast %cst_18 : f32 to vector<4x8x4xf32>
    %49 = arith.subf %48, %47 : vector<4x8x4xf32>
    %50 = tpu.concatenate %49, %46 in 2 : vector<4x8x4xf32>, vector<4x8x4xf32> -> vector<4x8x8xf32>
    %51 = vector.broadcast %12 : vector<1x8x8xf32> to vector<4x8x8xf32>
    %52 = arith.mulf %45, %51 : vector<4x8x8xf32>
    %53 = vector.broadcast %15 : vector<1x8x8xf32> to vector<4x8x8xf32>
    %54 = arith.mulf %50, %53 : vector<4x8x8xf32>
    %55 = arith.addf %52, %54 : vector<4x8x8xf32>
    %cst_19 = arith.constant 0.353553385 : f32
    %56 = vector.broadcast %cst_19 : f32 to vector<4x8x8xf32>
    %57 = arith.mulf %55, %56 : vector<4x8x8xf32>
    %58 = vector.extract_strided_slice %35 {offsets = [0, 32], sizes = [8, 32], strides = [1, 1]} : vector<8x96xf32> to vector<8x32xf32>
    %59 = vector.extract_strided_slice %58 {offsets = [0, 0], sizes = [8, 8], strides = [1, 1]} : vector<8x32xf32> to vector<8x8xf32>
    %60 = vector.extract_strided_slice %58 {offsets = [0, 8], sizes = [8, 8], strides = [1, 1]} : vector<8x32xf32> to vector<8x8xf32>
    %61 = vector.extract_strided_slice %58 {offsets = [0, 16], sizes = [8, 8], strides = [1, 1]} : vector<8x32xf32> to vector<8x8xf32>
    %62 = vector.extract_strided_slice %58 {offsets = [0, 24], sizes = [8, 8], strides = [1, 1]} : vector<8x32xf32> to vector<8x8xf32>
    %63 = vector.shape_cast %59 : vector<8x8xf32> to vector<1x8x8xf32>
    %64 = vector.shape_cast %60 : vector<8x8xf32> to vector<1x8x8xf32>
    %65 = vector.shape_cast %61 : vector<8x8xf32> to vector<1x8x8xf32>
    %66 = vector.shape_cast %62 : vector<8x8xf32> to vector<1x8x8xf32>
    %67 = tpu.concatenate %63, %64, %65, %66 in 0 : vector<1x8x8xf32>, vector<1x8x8xf32>, vector<1x8x8xf32>, vector<1x8x8xf32> -> vector<4x8x8xf32>
    %68 = vector.extract_strided_slice %67 {offsets = [0, 0, 0], sizes = [4, 8, 4], strides = [1, 1, 1]} : vector<4x8x8xf32> to vector<4x8x4xf32>
    %69 = vector.extract_strided_slice %67 {offsets = [0, 0, 4], sizes = [4, 8, 4], strides = [1, 1, 1]} : vector<4x8x8xf32> to vector<4x8x4xf32>
    %cst_20 = arith.constant 0.000000e+00 : f32
    %70 = vector.broadcast %cst_20 : f32 to vector<4x8x4xf32>
    %71 = arith.subf %70, %69 : vector<4x8x4xf32>
    %72 = tpu.concatenate %71, %68 in 2 : vector<4x8x4xf32>, vector<4x8x4xf32> -> vector<4x8x8xf32>
    %73 = vector.broadcast %12 : vector<1x8x8xf32> to vector<4x8x8xf32>
    %74 = arith.mulf %67, %73 : vector<4x8x8xf32>
    %75 = vector.broadcast %15 : vector<1x8x8xf32> to vector<4x8x8xf32>
    %76 = arith.mulf %72, %75 : vector<4x8x8xf32>
    %77 = arith.addf %74, %76 : vector<4x8x8xf32>
    %78 = vector.extract_strided_slice %35 {offsets = [0, 64], sizes = [8, 32], strides = [1, 1]} : vector<8x96xf32> to vector<8x32xf32>
    %79 = vector.extract_strided_slice %78 {offsets = [0, 0], sizes = [8, 8], strides = [1, 1]} : vector<8x32xf32> to vector<8x8xf32>
    %80 = vector.extract_strided_slice %78 {offsets = [0, 8], sizes = [8, 8], strides = [1, 1]} : vector<8x32xf32> to vector<8x8xf32>
    %81 = vector.extract_strided_slice %78 {offsets = [0, 16], sizes = [8, 8], strides = [1, 1]} : vector<8x32xf32> to vector<8x8xf32>
    %82 = vector.extract_strided_slice %78 {offsets = [0, 24], sizes = [8, 8], strides = [1, 1]} : vector<8x32xf32> to vector<8x8xf32>
    %83 = vector.shape_cast %79 : vector<8x8xf32> to vector<1x8x8xf32>
    %84 = vector.shape_cast %80 : vector<8x8xf32> to vector<1x8x8xf32>
    %85 = vector.shape_cast %81 : vector<8x8xf32> to vector<1x8x8xf32>
    %86 = vector.shape_cast %82 : vector<8x8xf32> to vector<1x8x8xf32>
    %87 = tpu.concatenate %83, %84, %85, %86 in 0 : vector<1x8x8xf32>, vector<1x8x8xf32>, vector<1x8x8xf32>, vector<1x8x8xf32> -> vector<4x8x8xf32>
    %88 = arith.truncf %57 : vector<4x8x8xf32> to vector<4x8x8xbf16>
    %89 = arith.truncf %77 : vector<4x8x8xf32> to vector<4x8x8xbf16>
    "tpu.trace_start"() <{level = 10 : i32, message = "nsd,ntd->nst"}> : () -> ()
    %cst_21 = arith.constant dense<0.000000e+00> : vector<4x8x8xf32>
    %90 = tpu.matmul %88, %89, %cst_21 {dimension_numbers = #tpu.dot_dimension_numbers<[2], [2], [1], [1], [0, 0, 0, 1, 1, 1], [0], [0]>} : vector<4x8x8xbf16>, vector<4x8x8xbf16>, vector<4x8x8xf32> -> vector<4x8x8xf32>
    "tpu.trace_stop"() : () -> ()
    %91 = vector.shape_cast %18 : vector<8x8xf32> to vector<1x8x8xf32>
    %92 = vector.broadcast %91 : vector<1x8x8xf32> to vector<4x8x8xf32>
    %93 = arith.addf %90, %92 : vector<4x8x8xf32>
    %cst_22 = arith.constant dense<0xFF800000> : vector<4x8xf32>
    %94 = vector.multi_reduction <maximumf>, %93, %cst_22 [2] : vector<4x8x8xf32> to vector<4x8xf32>
    %95 = vector.shape_cast %94 : vector<4x8xf32> to vector<4x8x1xf32>
    %96 = vector.broadcast %95 : vector<4x8x1xf32> to vector<4x8x8xf32>
    %97 = arith.subf %93, %96 : vector<4x8x8xf32>
    %98 = math.exp %97 : vector<4x8x8xf32>
    %cst_23 = arith.constant dense<0.000000e+00> : vector<4x8xf32>
    %99 = vector.multi_reduction <add>, %98, %cst_23 [2] : vector<4x8x8xf32> to vector<4x8xf32>
    %100 = vector.shape_cast %99 : vector<4x8xf32> to vector<4x8x1xf32>
    %101 = vector.broadcast %100 : vector<4x8x1xf32> to vector<4x8x8xf32>
    %102 = arith.divf %98, %101 : vector<4x8x8xf32>
    %103 = arith.truncf %102 : vector<4x8x8xf32> to vector<4x8x8xbf16>
    %104 = arith.truncf %87 : vector<4x8x8xf32> to vector<4x8x8xbf16>
    "tpu.trace_start"() <{level = 10 : i32, message = "nst,ntd->nsd"}> : () -> ()
    %cst_24 = arith.constant dense<0.000000e+00> : vector<4x8x8xf32>
    %105 = tpu.matmul %103, %104, %cst_24 {dimension_numbers = #tpu.dot_dimension_numbers<[2], [1], [1], [2], [0, 0, 0, 1, 1, 2], [0], [0]>} : vector<4x8x8xbf16>, vector<4x8x8xbf16>, vector<4x8x8xf32> -> vector<4x8x8xf32>
    "tpu.trace_stop"() : () -> ()
    %106 = vector.extract_strided_slice %105 {offsets = [0, 0, 0], sizes = [1, 8, 8], strides = [1, 1, 1]} : vector<4x8x8xf32> to vector<1x8x8xf32>
    %107 = vector.shape_cast %106 : vector<1x8x8xf32> to vector<8x8xf32>
    %108 = vector.extract_strided_slice %105 {offsets = [1, 0, 0], sizes = [1, 8, 8], strides = [1, 1, 1]} : vector<4x8x8xf32> to vector<1x8x8xf32>
    %109 = vector.shape_cast %108 : vector<1x8x8xf32> to vector<8x8xf32>
    %110 = vector.extract_strided_slice %105 {offsets = [2, 0, 0], sizes = [1, 8, 8], strides = [1, 1, 1]} : vector<4x8x8xf32> to vector<1x8x8xf32>
    %111 = vector.shape_cast %110 : vector<1x8x8xf32> to vector<8x8xf32>
    %112 = vector.extract_strided_slice %105 {offsets = [3, 0, 0], sizes = [1, 8, 8], strides = [1, 1, 1]} : vector<4x8x8xf32> to vector<1x8x8xf32>
    %113 = vector.shape_cast %112 : vector<1x8x8xf32> to vector<8x8xf32>
    %114 = tpu.concatenate %107, %109, %111, %113 in 1 : vector<8x8xf32>, vector<8x8xf32>, vector<8x8xf32>, vector<8x8xf32> -> vector<8x32xf32>
    %c0_25 = arith.constant 0 : index
    %c0_26 = arith.constant 0 : index
    %c0_27 = arith.constant 0 : index
    %115 = vector.load %arg9[%c0_25, %c0_26, %c0_27] : memref<1x32x32xbf16, #tpu.memory_space<vmem>>, vector<1x32x32xbf16>
    %116 = vector.shape_cast %115 : vector<1x32x32xbf16> to vector<32x32xbf16>
    %117 = arith.truncf %114 : vector<8x32xf32> to vector<8x32xbf16>
    %cst_28 = arith.constant dense<0.000000e+00> : vector<8x32xf32>
    %118 = tpu.matmul %117, %116, %cst_28 {dimension_numbers = #tpu.dot_dimension_numbers<[1], [0], [0], [1], [0, 0, 1, 1], [], []>} : vector<8x32xbf16>, vector<32x32xbf16>, vector<8x32xf32> -> vector<8x32xf32>
    %119 = arith.addf %7, %118 : vector<8x32xf32>
    %120 = vector.extract_strided_slice %9 {offsets = [1, 0], sizes = [1, 32], strides = [1, 1]} : vector<2x32xf32> to vector<1x32xf32>
    %121 = arith.mulf %119, %119 : vector<8x32xf32>
    %cst_29 = arith.constant dense<0.000000e+00> : vector<8xf32>
    %122 = vector.multi_reduction <add>, %121, %cst_29 [1] : vector<8x32xf32> to vector<8xf32>
    %123 = vector.shape_cast %122 : vector<8xf32> to vector<8x1xf32>
    %cst_30 = arith.constant 3.200000e+01 : f32
    %124 = vector.broadcast %cst_30 : f32 to vector<8x1xf32>
    %125 = arith.divf %123, %124 : vector<8x1xf32>
    %cst_31 = arith.constant 9.99999997E-7 : f32
    %126 = vector.broadcast %cst_31 : f32 to vector<8x1xf32>
    %127 = arith.addf %125, %126 : vector<8x1xf32>
    %128 = math.rsqrt %127 : vector<8x1xf32>
    %129 = vector.broadcast %128 : vector<8x1xf32> to vector<8x32xf32>
    %130 = arith.mulf %119, %129 : vector<8x32xf32>
    %131 = vector.broadcast %120 : vector<1x32xf32> to vector<8x32xf32>
    %132 = arith.mulf %130, %131 : vector<8x32xf32>
    %133 = arith.truncf %132 : vector<8x32xf32> to vector<8x32xbf16>
    %c0_32 = arith.constant 0 : index
    %c0_33 = arith.constant 0 : index
    %c0_34 = arith.constant 0 : index
    %134 = vector.load %arg10[%c0_32, %c0_33, %c0_34] : memref<1x32x128xbf16, #tpu.memory_space<vmem>>, vector<1x32x128xbf16>
    %135 = vector.shape_cast %134 : vector<1x32x128xbf16> to vector<32x128xbf16>
    %cst_35 = arith.constant dense<0.000000e+00> : vector<8x128xf32>
    %136 = tpu.matmul %133, %135, %cst_35 {dimension_numbers = #tpu.dot_dimension_numbers<[1], [0], [0], [1], [0, 0, 1, 1], [], []>} : vector<8x32xbf16>, vector<32x128xbf16>, vector<8x128xf32> -> vector<8x128xf32>
    %137 = vector.extract_strided_slice %136 {offsets = [0, 0], sizes = [8, 64], strides = [1, 1]} : vector<8x128xf32> to vector<8x64xf32>
    %138 = vector.extract_strided_slice %136 {offsets = [0, 64], sizes = [8, 64], strides = [1, 1]} : vector<8x128xf32> to vector<8x64xf32>
    %139 = arith.negf %137 : vector<8x64xf32>
    %140 = math.exp %139 : vector<8x64xf32>
    %cst_36 = arith.constant 1.000000e+00 : f32
    %141 = vector.broadcast %cst_36 : f32 to vector<8x64xf32>
    %142 = arith.addf %141, %140 : vector<8x64xf32>
    %143 = arith.divf %141, %142 : vector<8x64xf32>
    %144 = arith.mulf %137, %143 : vector<8x64xf32>
    %145 = arith.mulf %144, %138 : vector<8x64xf32>
    %c0_37 = arith.constant 0 : index
    %c0_38 = arith.constant 0 : index
    %c0_39 = arith.constant 0 : index
    %146 = vector.load %arg11[%c0_37, %c0_38, %c0_39] : memref<1x64x32xbf16, #tpu.memory_space<vmem>>, vector<1x64x32xbf16>
    %147 = vector.shape_cast %146 : vector<1x64x32xbf16> to vector<64x32xbf16>
    %148 = arith.truncf %145 : vector<8x64xf32> to vector<8x64xbf16>
    %cst_40 = arith.constant dense<0.000000e+00> : vector<8x32xf32>
    %149 = tpu.matmul %148, %147, %cst_40 {dimension_numbers = #tpu.dot_dimension_numbers<[1], [0], [0], [1], [0, 0, 1, 1], [], []>} : vector<8x64xbf16>, vector<64x32xbf16>, vector<8x32xf32> -> vector<8x32xf32>
    %150 = arith.addf %119, %149 : vector<8x32xf32>
    %151 = arith.index_cast %arg1 : i32 to index
    %c0_41 = arith.constant 0 : index
    %c0_42 = arith.constant 0 : index
    %152 = vector.load %arg13[%151, %c0_41, %c0_42] : memref<2x8x32xf32, #tpu.memory_space<vmem>>, vector<1x8x32xf32>
    %153 = vector.shape_cast %152 : vector<1x8x32xf32> to vector<8x32xf32>
    %154 = vector.shape_cast %150 : vector<8x32xf32> to vector<1x8x32xf32>
    tpu.vector_store %arg13[%151, %c0_41, %c0_42], %154 {strides = array<i32>} : memref<2x8x32xf32, #tpu.memory_space<vmem>>, vector<1x8x32xf32>,
    %c1_i32 = arith.constant 1 : i32
    %155 = arith.cmpi eq, %arg0, %c1_i32 : i32
    %156 = arith.extui %155 : i1 to i32
    %c0_i32_43 = arith.constant 0 : i32
    %157 = arith.cmpi ne, %156, %c0_i32_43 : i32
    scf.if %157 {
      %158 = arith.index_cast %arg1 : i32 to index
      %159 = arith.index_cast %1 : i32 to index
      %c0_44 = arith.constant 0 : index
      %160 = vector.load %arg13[%158, %159, %c0_44] : memref<2x8x32xf32, #tpu.memory_space<vmem>>, vector<1x1x32xf32>
      %161 = vector.shape_cast %160 : vector<1x1x32xf32> to vector<1x32xf32>
      %c0_45 = arith.constant 0 : index
      %c0_46 = arith.constant 0 : index
      %162 = vector.load %arg6[%c0_45, %c0_46] : memref<1x32xf32, #tpu.memory_space<vmem>>, vector<1x32xf32>
      %163 = arith.mulf %161, %161 : vector<1x32xf32>
      %cst_47 = arith.constant dense<0.000000e+00> : vector<1xf32>
      %164 = vector.multi_reduction <add>, %163, %cst_47 [1] : vector<1x32xf32> to vector<1xf32>
      %165 = vector.shape_cast %164 : vector<1xf32> to vector<1x1xf32>
      %cst_48 = arith.constant 3.200000e+01 : f32
      %166 = vector.broadcast %cst_48 : f32 to vector<1x1xf32>
      %167 = arith.divf %165, %166 : vector<1x1xf32>
      %cst_49 = arith.constant 9.99999997E-7 : f32
      %168 = vector.broadcast %cst_49 : f32 to vector<1x1xf32>
      %169 = arith.addf %167, %168 : vector<1x1xf32>
      %170 = math.rsqrt %169 : vector<1x1xf32>
      %171 = vector.broadcast %170 : vector<1x1xf32> to vector<1x32xf32>
      %172 = arith.mulf %161, %171 : vector<1x32xf32>
      %173 = arith.mulf %172, %162 : vector<1x32xf32>
      %174 = arith.mulf %173, %173 : vector<1x32xf32>
      %cst_50 = arith.constant dense<0.000000e+00> : vector<1xf32>
      %175 = vector.multi_reduction <add>, %174, %cst_50 [1] : vector<1x32xf32> to vector<1xf32>
      %176 = vector.shape_cast %175 : vector<1xf32> to vector<1x1xf32>
      %cst_51 = arith.constant 1.000000e-24 : f32
      %177 = vector.broadcast %cst_51 : f32 to vector<1x1xf32>
      %178 = arith.maximumf %176, %177 : vector<1x1xf32>
      %179 = math.rsqrt %178 : vector<1x1xf32>
      %180 = vector.broadcast %179 : vector<1x1xf32> to vector<1x32xf32>
      %181 = arith.mulf %173, %180 : vector<1x32xf32>
      %182 = arith.index_cast %arg1 : i32 to index
      %c0_52 = arith.constant 0 : index
      %183 = vector.load %arg12[%182, %c0_52] : memref<2x32xf32, #tpu.memory_space<vmem>>, vector<1x32xf32>
      tpu.vector_store %arg12[%182, %c0_52], %181 {strides = array<i32>} : memref<2x32xf32, #tpu.memory_space<vmem>>, vector<1x32xf32>,
    } else {
    }
    return
  }
  func.func @transform_0(%arg0: i32, %arg1: i32, %arg2: memref<2xi32, #tpu.memory_space<smem>>) -> (i32, i32, i32) {
    %c0_i32 = arith.constant 0 : i32
    %c0_i32_0 = arith.constant 0 : i32
    %c0_i32_1 = arith.constant 0 : i32
    %c0_i32_2 = arith.constant 0 : i32
    return %c0_i32, %c0_i32_0, %c0_i32_1 : i32, i32, i32
  }
  func.func @transform_1(%arg0: i32, %arg1: i32, %arg2: memref<2xi32, #tpu.memory_space<smem>>) -> (i32, i32, i32) {
    %c0_i32 = arith.constant 0 : i32
    %c0_i32_0 = arith.constant 0 : i32
    %c0_i32_1 = arith.constant 0 : i32
    %c0_i32_2 = arith.constant 0 : i32
    return %c0_i32, %c0_i32_0, %c0_i32_1 : i32, i32, i32
  }
  func.func @transform_2(%arg0: i32, %arg1: i32, %arg2: memref<2xi32, #tpu.memory_space<smem>>) -> (i32, i32, i32) {
    %c0_i32 = arith.constant 0 : i32
    %c0_i32_0 = arith.constant 0 : i32
    %c0_i32_1 = arith.constant 0 : i32
    %c0_i32_2 = arith.constant 0 : i32
    return %c0_i32, %c0_i32_0, %c0_i32_1 : i32, i32, i32
  }
  func.func @transform_3(%arg0: i32, %arg1: i32, %arg2: memref<2xi32, #tpu.memory_space<smem>>) -> (i32, i32) {
    %c0_i32 = arith.constant 0 : i32
    %c0_i32_0 = arith.constant 0 : i32
    %c0_i32_1 = arith.constant 0 : i32
    return %c0_i32, %c0_i32_0 : i32, i32
  }
  func.func @transform_4(%arg0: i32, %arg1: i32, %arg2: memref<2xi32, #tpu.memory_space<smem>>) -> (i32, i32, i32) {
    %c0_i32 = arith.constant 0 : i32
    %c0_i32_0 = arith.constant 0 : i32
    %c0_i32_1 = arith.constant 0 : i32
    return %arg0, %c0_i32, %c0_i32_0 : i32, i32, i32
  }
  func.func @transform_5(%arg0: i32, %arg1: i32, %arg2: memref<2xi32, #tpu.memory_space<smem>>) -> (i32, i32, i32) {
    %c0_i32 = arith.constant 0 : i32
    %c0_i32_0 = arith.constant 0 : i32
    %c0_i32_1 = arith.constant 0 : i32
    return %arg0, %c0_i32, %c0_i32_0 : i32, i32, i32
  }
  func.func @transform_6(%arg0: i32, %arg1: i32, %arg2: memref<2xi32, #tpu.memory_space<smem>>) -> (i32, i32, i32) {
    %c0_i32 = arith.constant 0 : i32
    %c0_i32_0 = arith.constant 0 : i32
    %c0_i32_1 = arith.constant 0 : i32
    return %arg0, %c0_i32, %c0_i32_0 : i32, i32, i32
  }
  func.func @transform_7(%arg0: i32, %arg1: i32, %arg2: memref<2xi32, #tpu.memory_space<smem>>) -> (i32, i32, i32) {
    %c0_i32 = arith.constant 0 : i32
    %c0_i32_0 = arith.constant 0 : i32
    %c0_i32_1 = arith.constant 0 : i32
    return %arg0, %c0_i32, %c0_i32_0 : i32, i32, i32
  }
  func.func @transform_8(%arg0: i32, %arg1: i32, %arg2: memref<2xi32, #tpu.memory_space<smem>>) -> (i32, i32, i32) {
    %c0_i32 = arith.constant 0 : i32
    %c0_i32_0 = arith.constant 0 : i32
    %c0_i32_1 = arith.constant 0 : i32
    return %arg0, %c0_i32, %c0_i32_0 : i32, i32, i32
  }
  func.func @transform_9(%arg0: i32, %arg1: i32, %arg2: memref<2xi32, #tpu.memory_space<smem>>) -> (i32, i32) {
    %c0_i32 = arith.constant 0 : i32
    %c0_i32_0 = arith.constant 0 : i32
    %c0_i32_1 = arith.constant 0 : i32
    return %c0_i32, %c0_i32_0 : i32, i32
  }
}

</mosaic_0001>

<llo_original>
// kernel: e5_mistral_forward.1
$region0: #{e5_mistral_forward.1}
  #allocation0 [shape = 'u32[]', space=smem, size = 0x4, offset = 0x4, fixed_abs, tag = 'smem constant byte address 0x4 - core index']
  #allocation1 [shape = 'u32[144,128]{1,0:T(1,128)}', space=vmem, size = 0x12000, scoped, tag = 'internal scratch']
  #allocation2 [shape = 'f32[2,8,32]{2,1,0:T(8,128)}', space=vmem, size = 0x2000, scoped, tag = 'scratch operand']
  #allocation3 [shape = 's32[1]{0}', space=sflag, size = 0x4, scoped, tag = 'scoped memory for e5_mistral_forward.1']
  #allocation4 [shape = 'u8[512]{0}', space=smem, size = 0x200, scoped, tag = 'prefetched SMEM operand 0']
  %s0 = inlined_call_operand.vmem [shape: s32[2], index: 0, kind: input, shape index: {}]
  %s1 = inlined_call_operand.vmem [shape: f32[2,8,32], index: 1, kind: input, shape index: {}]
  %s2 = inlined_call_operand.vmem [shape: f32[2,8,8], index: 2, kind: input, shape index: {}]
  %s3 = inlined_call_operand.vmem [shape: f32[2,8,8], index: 3, kind: input, shape index: {}]
  %s4 = inlined_call_operand.vmem [shape: f32[1,32], index: 4, kind: input, shape index: {}]
  %s5 = inlined_call_operand.vmem [shape: f32[2,2,32], index: 5, kind: input, shape index: {}]
  %s6 = inlined_call_operand.vmem [shape: bf16[2,32,96], index: 6, kind: input, shape index: {}]
  %s7 = inlined_call_operand.vmem [shape: bf16[2,32,32], index: 7, kind: input, shape index: {}]
  %s8 = inlined_call_operand.vmem [shape: bf16[2,32,128], index: 8, kind: input, shape index: {}]
  %s9 = inlined_call_operand.vmem [shape: bf16[2,64,32], index: 9, kind: input, shape index: {}]
  %s10 = inlined_call_operand.hbm [shape: f32[2,32], index: 10, kind: output, shape index: {}]
  %s11 = sld [smem:[#allocation0]]
  $region77: #{e5_mistral_forward.1} parent=0
    _
  %s13 = ssub.s32 1, %s11
  %s14 = scalar_select 0, %s13, %s11
  %s15 = sshll.u32 %s0, 4
  %s16 = int_to_ptr.vmem [resolvable:$true] %s15
  %18 = dma.vmem_to_smem %s16, 16, [#allocation4], [#allocation3]
  %19 = dma.done [#allocation3], 16
  %20 = sfence
  $region1: #{e5_mistral_forward.1} parent=0
    #allocation5 [shape = 'u8[1024]{0}', space=vmem, size = 0x400, scoped, tag = 'output window, operand 0, single buffered']
    #allocation6 [shape = 's32[2]{0}', space=sflag, size = 0x8, scoped, tag = 'scoped memory for e5_mistral_forward.1']
    %21 = vsyncpa [#allocation6], 0
    loop: start=0, step=1, limit=6
    $region2: #{e5_mistral_forward.1} parent=1 // loop_pre_header
      _
    $region3: #{e5_mistral_forward.1} parent=1 // loop_header
      %s23 = sphi 0, %s27
      %p24 = scmp.ge.s32.totalorder %s23, 6
      %s30 = sphi 0, %s42
      %s31 = sphi 0, %s38
      %s32 = sphi 0, %s30
      %s33 = sphi 0, %s31
      %s34 = sphi 0, %s32
      %s35 = sphi 0, %s33
      %s43 = sphi 0, %s43
      %s45 = sphi 0, %s43
      %s46 = sphi 0, %s45
      %s60 = sphi 0, %s46
      %s64 = sphi 0, %s64
      %s66 = sphi 0, %s64
      %s67 = sphi 0, %s66
      %s81 = sphi 0, %s67
      %s85 = sphi 0, %s85
      %s87 = sphi 0, %s85
      %s88 = sphi 0, %s87
      %s102 = sphi 0, %s88
      %s106 = sphi 0, %s106
      %s108 = sphi 0, %s106
      %s109 = sphi 0, %s108
      %s123 = sphi 0, %s109
      %s129 = sphi 0, %s131
      %s132 = sphi 0, %s129
      %s133 = sphi 0, %s132
      %s149 = sphi 0, %s133
      %s155 = sphi 0, %s157
      %s158 = sphi 0, %s155
      %s159 = sphi 0, %s158
      %s175 = sphi 0, %s159
      %s181 = sphi 0, %s183
      %s184 = sphi 0, %s181
      %s185 = sphi 0, %s184
      %s201 = sphi 0, %s185
      %s207 = sphi 0, %s209
      %s210 = sphi 0, %s207
      %s211 = sphi 0, %s210
      %s227 = sphi 0, %s211
      %s233 = sphi 0, %s235
      %s236 = sphi 0, %s233
      %s237 = sphi 0, %s236
      %s253 = sphi 0, %s237
      %s257 = sphi 0, %s257
      %s259 = sphi 0, %s257
      %s260 = sphi 0, %s259
      %s274 = sphi 0, %s260
    $region4: #{e5_mistral_forward.1} parent=1 // loop_header_branch
      %26 = sbr.rel (%p24) target = $region8
    $region5: #{e5_mistral_forward.1} parent=1 // loop_body
      %s28 = ssub.s32 %s23, 1
      %s29 = ssub.s32 %s23, 2
      %s36 = sadd.s32 1, %s31
      %p37 = scmp.ge.s32.totalorder %s36, 2
      %s38 = scalar_select %p37, 0, %s36
      %s39 = sadd.s32 1, %s30
      %s40 = scalar_select %p37, %s39, %s30
      %p41 = scmp.ge.s32.totalorder %s40, 2
      %s42 = scalar_select %p41, 0, %s40
      %s44 = sadd.s32 %s43, 1
      %p47 = scmp.eq.s32.totalorder %s23, 3
      %p48 = scmp.ne.s32.totalorder %s43, %s45
      %p49 = scmp.eq.s32.totalorder %s23, 0
      %p50 = por %p48, %p49
      %p51 = scmp.ne.s32.totalorder %s43, %s45
      %p52 = scmp.eq.s32.totalorder %s28, 3
      %p53 = por %p51, %p52
      %p54 = scmp.ne.s32.totalorder %s45, %s46
      %p55 = scmp.eq.s32.totalorder %s28, 0
      %p56 = por %p54, %p55
      %p57 = scmp.ne.s32.totalorder %s45, %s46
      %p58 = scmp.eq.s32.totalorder %s29, 3
      %p59 = por %p57, %p58
      %p61 = scmp.ne.s32.totalorder %s46, %s60
      %p62 = scmp.eq.s32.totalorder %s29, 0
      %p63 = por %p61, %p62
      %s65 = sadd.s32 %s64, 1
      %p68 = scmp.eq.s32.totalorder %s23, 3
      %p69 = scmp.ne.s32.totalorder %s64, %s66
      %p70 = scmp.eq.s32.totalorder %s23, 0
      %p71 = por %p69, %p70
      %p72 = scmp.ne.s32.totalorder %s64, %s66
      %p73 = scmp.eq.s32.totalorder %s28, 3
      %p74 = por %p72, %p73
      %p75 = scmp.ne.s32.totalorder %s66, %s67
      %p76 = scmp.eq.s32.totalorder %s28, 0
      %p77 = por %p75, %p76
      %p78 = scmp.ne.s32.totalorder %s66, %s67
      %p79 = scmp.eq.s32.totalorder %s29, 3
      %p80 = por %p78, %p79
      %p82 = scmp.ne.s32.totalorder %s67, %s81
      %p83 = scmp.eq.s32.totalorder %s29, 0
      %p84 = por %p82, %p83
      %s86 = sadd.s32 %s85, 1
      %p89 = scmp.eq.s32.totalorder %s23, 3
      %p90 = scmp.ne.s32.totalorder %s85, %s87
      %p91 = scmp.eq.s32.totalorder %s23, 0
      %p92 = por %p90, %p91
      %p93 = scmp.ne.s32.totalorder %s85, %s87
      %p94 = scmp.eq.s32.totalorder %s28, 3
      %p95 = por %p93, %p94
      %p96 = scmp.ne.s32.totalorder %s87, %s88
      %p97 = scmp.eq.s32.totalorder %s28, 0
      %p98 = por %p96, %p97
      %p99 = scmp.ne.s32.totalorder %s87, %s88
      %p100 = scmp.eq.s32.totalorder %s29, 3
      %p101 = por %p99, %p100
      %p103 = scmp.ne.s32.totalorder %s88, %s102
      %p104 = scmp.eq.s32.totalorder %s29, 0
      %p105 = por %p103, %p104
      %s107 = sadd.s32 %s106, 1
      %p110 = scmp.eq.s32.totalorder %s23, 3
      %p111 = scmp.ne.s32.totalorder %s106, %s108
      %p112 = scmp.eq.s32.totalorder %s23, 0
      %p113 = por %p111, %p112
      %p114 = scmp.ne.s32.totalorder %s106, %s108
      %p115 = scmp.eq.s32.totalorder %s28, 3
      %p116 = por %p114, %p115
      %p117 = scmp.ne.s32.totalorder %s108, %s109
      %p118 = scmp.eq.s32.totalorder %s28, 0
      %p119 = por %p117, %p118
      %p120 = scmp.ne.s32.totalorder %s108, %s109
      %p121 = scmp.eq.s32.totalorder %s29, 3
      %p122 = por %p120, %p121
      %p124 = scmp.ne.s32.totalorder %s109, %s123
      %p125 = scmp.eq.s32.totalorder %s29, 0
      %p126 = por %p124, %p125
      %s127 = ssub.s32 %s30, %s42
      %p128 = scmp.eq.s32.totalorder %s127, 0
      %s130 = sadd.s32 %s129, 1
      %s131 = scalar_select %p128, %s129, %s130
      %p134 = pneg %p128
      %p135 = scmp.eq.s32.totalorder %s23, 3
      %p136 = por %p134, %p135
      %p137 = scmp.ne.s32.totalorder %s129, %s132
      %p138 = scmp.eq.s32.totalorder %s23, 0
      %p139 = por %p137, %p138
      %p140 = scmp.ne.s32.totalorder %s129, %s132
      %p141 = scmp.eq.s32.totalorder %s28, 3
      %p142 = por %p140, %p141
      %p143 = scmp.ne.s32.totalorder %s132, %s133
      %p144 = scmp.eq.s32.totalorder %s28, 0
      %p145 = por %p143, %p144
      %p146 = scmp.ne.s32.totalorder %s132, %s133
      %p147 = scmp.eq.s32.totalorder %s29, 3
      %p148 = por %p146, %p147
      %p150 = scmp.ne.s32.totalorder %s133, %s149
      %p151 = scmp.eq.s32.totalorder %s29, 0
      %p152 = por %p150, %p151
      %s153 = ssub.s32 %s30, %s42
      %p154 = scmp.eq.s32.totalorder %s153, 0
      %s156 = sadd.s32 %s155, 1
      %s157 = scalar_select %p154, %s155, %s156
      %p160 = pneg %p154
      %p161 = scmp.eq.s32.totalorder %s23, 3
      %p162 = por %p160, %p161
      %p163 = scmp.ne.s32.totalorder %s155, %s158
      %p164 = scmp.eq.s32.totalorder %s23, 0
      %p165 = por %p163, %p164
      %p166 = scmp.ne.s32.totalorder %s155, %s158
      %p167 = scmp.eq.s32.totalorder %s28, 3
      %p168 = por %p166, %p167
      %p169 = scmp.ne.s32.totalorder %s158, %s159
      %p170 = scmp.eq.s32.totalorder %s28, 0
      %p171 = por %p169, %p170
      %p172 = scmp.ne.s32.totalorder %s158, %s159
      %p173 = scmp.eq.s32.totalorder %s29, 3
      %p174 = por %p172, %p173
      %p176 = scmp.ne.s32.totalorder %s159, %s175
      %p177 = scmp.eq.s32.totalorder %s29, 0
      %p178 = por %p176, %p177
      %s179 = ssub.s32 %s30, %s42
      %p180 = scmp.eq.s32.totalorder %s179, 0
      %s182 = sadd.s32 %s181, 1
      %s183 = scalar_select %p180, %s181, %s182
      %p186 = pneg %p180
      %p187 = scmp.eq.s32.totalorder %s23, 3
      %p188 = por %p186, %p187
      %p189 = scmp.ne.s32.totalorder %s181, %s184
      %p190 = scmp.eq.s32.totalorder %s23, 0
      %p191 = por %p189, %p190
      %p192 = scmp.ne.s32.totalorder %s181, %s184
      %p193 = scmp.eq.s32.totalorder %s28, 3
      %p194 = por %p192, %p193
      %p195 = scmp.ne.s32.totalorder %s184, %s185
      %p196 = scmp.eq.s32.totalorder %s28, 0
      %p197 = por %p195, %p196
      %p198 = scmp.ne.s32.totalorder %s184, %s185
      %p199 = scmp.eq.s32.totalorder %s29, 3
      %p200 = por %p198, %p199
      %p202 = scmp.ne.s32.totalorder %s185, %s201
      %p203 = scmp.eq.s32.totalorder %s29, 0
      %p204 = por %p202, %p203
      %s205 = ssub.s32 %s30, %s42
      %p206 = scmp.eq.s32.totalorder %s205, 0
      %s208 = sadd.s32 %s207, 1
      %s209 = scalar_select %p206, %s207, %s208
      %p212 = pneg %p206
      %p213 = scmp.eq.s32.totalorder %s23, 3
      %p214 = por %p212, %p213
      %p215 = scmp.ne.s32.totalorder %s207, %s210
      %p216 = scmp.eq.s32.totalorder %s23, 0
      %p217 = por %p215, %p216
      %p218 = scmp.ne.s32.totalorder %s207, %s210
      %p219 = scmp.eq.s32.totalorder %s28, 3
      %p220 = por %p218, %p219
      %p221 = scmp.ne.s32.totalorder %s210, %s211
      %p222 = scmp.eq.s32.totalorder %s28, 0
      %p223 = por %p221, %p222
      %p224 = scmp.ne.s32.totalorder %s210, %s211
      %p225 = scmp.eq.s32.totalorder %s29, 3
      %p226 = por %p224, %p225
      %p228 = scmp.ne.s32.totalorder %s211, %s227
      %p229 = scmp.eq.s32.totalorder %s29, 0
      %p230 = por %p228, %p229
      %s231 = ssub.s32 %s30, %s42
      %p232 = scmp.eq.s32.totalorder %s231, 0
      %s234 = sadd.s32 %s233, 1
      %s235 = scalar_select %p232, %s233, %s234
      %p238 = pneg %p232
      %p239 = scmp.eq.s32.totalorder %s23, 3
      %p240 = por %p238, %p239
      %p241 = scmp.ne.s32.totalorder %s233, %s236
      %p242 = scmp.eq.s32.totalorder %s23, 0
      %p243 = por %p241, %p242
      %p244 = scmp.ne.s32.totalorder %s233, %s236
      %p245 = scmp.eq.s32.totalorder %s28, 3
      %p246 = por %p244, %p245
      %p247 = scmp.ne.s32.totalorder %s236, %s237
      %p248 = scmp.eq.s32.totalorder %s28, 0
      %p249 = por %p247, %p248
      %p250 = scmp.ne.s32.totalorder %s236, %s237
      %p251 = scmp.eq.s32.totalorder %s29, 3
      %p252 = por %p250, %p251
      %p254 = scmp.ne.s32.totalorder %s237, %s253
      %p255 = scmp.eq.s32.totalorder %s29, 0
      %p256 = por %p254, %p255
      %s258 = sadd.s32 %s257, 1
      %p261 = scmp.eq.s32.totalorder %s23, 3
      %p262 = scmp.ne.s32.totalorder %s257, %s259
      %p263 = scmp.eq.s32.totalorder %s23, 0
      %p264 = por %p262, %p263
      %p265 = scmp.ne.s32.totalorder %s257, %s259
      %p266 = scmp.eq.s32.totalorder %s28, 3
      %p267 = por %p265, %p266
      %p268 = scmp.ne.s32.totalorder %s259, %s260
      %p269 = scmp.eq.s32.totalorder %s28, 0
      %p270 = por %p268, %p269
      %p271 = scmp.ne.s32.totalorder %s259, %s260
      %p272 = scmp.eq.s32.totalorder %s29, 3
      %p273 = por %p271, %p272
      %p275 = scmp.ne.s32.totalorder %s260, %s274
      %p276 = scmp.eq.s32.totalorder %s29, 0
      %p277 = por %p275, %p276
      %p278 = scmp.le.s32.totalorder 1, %s23
      %p279 = scmp.lt.s32.totalorder %s23, 5
      %p280 = pnand %p278, %p279
      %p281 = pneg %p280
      // Predicated region
      $region9: #{e5_mistral_forward.1} parent=5 // pred_check
        _
      $region10: #{e5_mistral_forward.1} parent=5 // pred_check_branch
        %283 = sbr.rel (%p280) target = $region12
      $region11: #{e5_mistral_forward.1} parent=5 // pred_region
        %s284 = ssub.s32 %s23, 1
        // Predicated region
        $region13: #{e5_mistral_forward.1} parent=11 // pred_check
          %p285 = pneg %p56
        $region14: #{e5_mistral_forward.1} parent=11 // pred_check_branch
          %287 = sbr.rel (%p285) target = $region16
        $region15: #{e5_mistral_forward.1} parent=11 // pred_region
          _
        $region16: #{e5_mistral_forward.1} parent=11 // pred_fallthru
          _
        // Predicated region
        $region17: #{e5_mistral_forward.1} parent=11 // pred_check
          %p288 = pneg %p77
        $region18: #{e5_mistral_forward.1} parent=11 // pred_check_branch
          %290 = sbr.rel (%p288) target = $region20
        $region19: #{e5_mistral_forward.1} parent=11 // pred_region
          _
        $region20: #{e5_mistral_forward.1} parent=11 // pred_fallthru
          _
        // Predicated region
        $region21: #{e5_mistral_forward.1} parent=11 // pred_check
          %p291 = pneg %p98
        $region22: #{e5_mistral_forward.1} parent=11 // pred_check_branch
          %293 = sbr.rel (%p291) target = $region24
        $region23: #{e5_mistral_forward.1} parent=11 // pred_region
          _
        $region24: #{e5_mistral_forward.1} parent=11 // pred_fallthru
          _
        // Predicated region
        $region25: #{e5_mistral_forward.1} parent=11 // pred_check
          %p294 = pneg %p119
        $region26: #{e5_mistral_forward.1} parent=11 // pred_check_branch
          %296 = sbr.rel (%p294) target = $region28
        $region27: #{e5_mistral_forward.1} parent=11 // pred_region
          _
        $region28: #{e5_mistral_forward.1} parent=11 // pred_fallthru
          _
      $region12: #{e5_mistral_forward.1} parent=5 // pred_fallthru
        _
      %p297 = scmp.lt.s32.totalorder %s23, 4
      // Predicated region
      $region29: #{e5_mistral_forward.1} parent=5 // pred_check
        %p298 = pneg %p297
      $region30: #{e5_mistral_forward.1} parent=5 // pred_check_branch
        %300 = sbr.rel (%p298) target = $region32
      $region31: #{e5_mistral_forward.1} parent=5 // pred_region
        // Predicated region
        $region33: #{e5_mistral_forward.1} parent=31 // pred_check
          %p301 = pneg %p139
        $region34: #{e5_mistral_forward.1} parent=31 // pred_check_branch
          %303 = sbr.rel (%p301) target = $region36
        $region35: #{e5_mistral_forward.1} parent=31 // pred_region
          %p304 = scmp.lt.s32.totalorder %s30, 1
          %s305 = scalar_select %p304, %s30, 1
          %s306 = smul.addr %s305, 2
          %s307 = scalar_lea.vmem %s5, %s306
        $region36: #{e5_mistral_forward.1} parent=31 // pred_fallthru
          _
        // Predicated region
        $region37: #{e5_mistral_forward.1} parent=31 // pred_check
          %p308 = pneg %p165
        $region38: #{e5_mistral_forward.1} parent=31 // pred_check_branch
          %310 = sbr.rel (%p308) target = $region40
        $region39: #{e5_mistral_forward.1} parent=31 // pred_region
          %p311 = scmp.lt.s32.totalorder %s30, 1
          %s312 = scalar_select %p311, %s30, 1
          %s313 = smul.addr %s312, 4
          %s314 = smul.addr %s313, 4
          %s315 = scalar_lea.vmem %s6, %s314
        $region40: #{e5_mistral_forward.1} parent=31 // pred_fallthru
          _
        // Predicated region
        $region41: #{e5_mistral_forward.1} parent=31 // pred_check
          %p316 = pneg %p191
        $region42: #{e5_mistral_forward.1} parent=31 // pred_check_branch
          %318 = sbr.rel (%p316) target = $region44
        $region43: #{e5_mistral_forward.1} parent=31 // pred_region
          %p319 = scmp.lt.s32.totalorder %s30, 1
          %s320 = scalar_select %p319, %s30, 1
          %s321 = smul.addr %s320, 4
          %s322 = smul.addr %s321, 4
          %s323 = scalar_lea.vmem %s7, %s322
        $region44: #{e5_mistral_forward.1} parent=31 // pred_fallthru
          _
        // Predicated region
        $region45: #{e5_mistral_forward.1} parent=31 // pred_check
          %p324 = pneg %p217
        $region46: #{e5_mistral_forward.1} parent=31 // pred_check_branch
          %326 = sbr.rel (%p324) target = $region48
        $region47: #{e5_mistral_forward.1} parent=31 // pred_region
          %p327 = scmp.lt.s32.totalorder %s30, 1
          %s328 = scalar_select %p327, %s30, 1
          %s329 = smul.addr %s328, 4
          %s330 = smul.addr %s329, 4
          %s331 = scalar_lea.vmem %s8, %s330
        $region48: #{e5_mistral_forward.1} parent=31 // pred_fallthru
          _
        // Predicated region
        $region49: #{e5_mistral_forward.1} parent=31 // pred_check
          %p332 = pneg %p243
        $region50: #{e5_mistral_forward.1} parent=31 // pred_check_branch
          %334 = sbr.rel (%p332) target = $region52
        $region51: #{e5_mistral_forward.1} parent=31 // pred_region
          %p335 = scmp.lt.s32.totalorder %s30, 1
          %s336 = scalar_select %p335, %s30, 1
          %s337 = smul.addr %s336, 8
          %s338 = smul.addr %s337, 4
          %s339 = scalar_lea.vmem %s9, %s338
        $region52: #{e5_mistral_forward.1} parent=31 // pred_fallthru
          _
      $region32: #{e5_mistral_forward.1} parent=5 // pred_fallthru
        _
      %p340 = scmp.le.s32.totalorder 1, %s23
      %p341 = scmp.lt.s32.totalorder %s23, 5
      %p342 = pnand %p340, %p341
      %p343 = pneg %p342
      // Predicated region
      $region53: #{e5_mistral_forward.1} parent=5 // pred_check
        _
      $region54: #{e5_mistral_forward.1} parent=5 // pred_check_branch
        %345 = sbr.rel (%p342) target = $region56
      $region55: #{e5_mistral_forward.1} parent=5 // pred_region
        %s346 = ssub.s32 %s23, 1
        %p347 = pneg %p56
        %p348 = pneg %p53
        %p349 = pneg %p77
        %p350 = pneg %p74
        %p351 = pneg %p98
        %p352 = pneg %p95
        %p353 = pneg %p119
        %p354 = pneg %p116
        %p355 = scmp.lt.s32.totalorder %s32, 1
        %s356 = scalar_select %p355, %s32, 1
        %s357 = smul.addr %s356, 2
        %s358 = scalar_lea.vmem %s5, %s357
        %p359 = pneg %p145
        %p360 = pneg %p142
        %p361 = scmp.lt.s32.totalorder %s32, 1
        %s362 = scalar_select %p361, %s32, 1
        %s363 = smul.addr %s362, 4
        %s364 = smul.addr %s363, 4
        %s365 = scalar_lea.vmem %s6, %s364
        %p366 = pneg %p171
        %p367 = pneg %p168
        %p368 = scmp.lt.s32.totalorder %s32, 1
        %s369 = scalar_select %p368, %s32, 1
        %s370 = smul.addr %s369, 4
        %s371 = smul.addr %s370, 4
        %s372 = scalar_lea.vmem %s7, %s371
        %p373 = pneg %p197
        %p374 = pneg %p194
        %p375 = scmp.lt.s32.totalorder %s32, 1
        %s376 = scalar_select %p375, %s32, 1
        %s377 = smul.addr %s376, 4
        %s378 = smul.addr %s377, 4
        %s379 = scalar_lea.vmem %s8, %s378
        %p380 = pneg %p223
        %p381 = pneg %p220
        %p382 = scmp.lt.s32.totalorder %s32, 1
        %s383 = scalar_select %p382, %s32, 1
        %s384 = smul.addr %s383, 8
        %s385 = smul.addr %s384, 4
        %s386 = scalar_lea.vmem %s9, %s385
        %p387 = pneg %p249
        %p388 = pneg %p246
        %p389 = pneg %p270
        %p390 = pneg %p267
        %p391 = scmp.lt.s32.totalorder %s32, 1
        %s392 = scalar_select %p391, %s32, 1
        %s393 = smul.addr %s392, 2
        %s394 = scalar_lea.vmem %s5, %s393
        %p395 = scmp.lt.s32.totalorder %s32, 1
        %s396 = scalar_select %p395, %s32, 1
        %s397 = smul.addr %s396, 4
        %s398 = smul.addr %s397, 4
        %s399 = scalar_lea.vmem %s6, %s398
        %p400 = scmp.lt.s32.totalorder %s32, 1
        %s401 = scalar_select %p400, %s32, 1
        %s402 = smul.addr %s401, 4
        %s403 = smul.addr %s402, 4
        %s404 = scalar_lea.vmem %s7, %s403
        %p405 = scmp.lt.s32.totalorder %s32, 1
        %s406 = scalar_select %p405, %s32, 1
        %s407 = smul.addr %s406, 4
        %s408 = smul.addr %s407, 4
        %s409 = scalar_lea.vmem %s8, %s408
        %p410 = scmp.lt.s32.totalorder %s32, 1
        %s411 = scalar_select %p410, %s32, 1
        %s412 = smul.addr %s411, 8
        %s413 = smul.addr %s412, 4
        %s414 = scalar_lea.vmem %s9, %s413
        %s416 = sld [smem:[#allocation4 + %s33]]
        %p417 = scmp.eq.s32.totalorder %s32, 0
        // Predicated region
        $region57: #{e5_mistral_forward.1} parent=55 // pred_check
          %p418 = pneg %p417
        $region58: #{e5_mistral_forward.1} parent=55 // pred_check_branch
          %420 = sbr.rel (%p418) target = $region60
        $region59: #{e5_mistral_forward.1} parent=55 // pred_region
          %s421 = smul.u32 %s33, 8
          %s422 = scalar_lea.vmem %s1, %s421
          %v423 = vld [vmem:[%s422] sm:$0xff]
          %s424 = scalar_lea.vmem [#allocation2], %s421
          %vm425 = vcmask 261120
          %426 = vst.msk [vmem:[%s424] sm:$0xff] %vm425, %v423
        $region60: #{e5_mistral_forward.1} parent=55 // pred_fallthru
          _
        %s427 = smul.u32 %s33, 8
        %s428 = scalar_lea.vmem [#allocation2], %s427
        %v429 = vld [vmem:[%s428] sm:$0xff]
        %v430 = vld [vmem:[%s394] sm:$0x3]
        %v431 = vld [vmem:[%s3] sm:$0xff]
        %s432 = scalar_lea.vmem %s3, 8
        %v433 = vld [vmem:[%s432] sm:$0xff]
        %s434 = scalar_lea.vmem %s2, %s427
        %v435 = vld [vmem:[%s434] sm:$0xff]
        %v436 = vmul.f32 %v429, %v429
        %vm437 = vcmask 261120
        %v438 = vsel %vm437, %v436, 0.0
        %439 = vadd.xlane.f32.xlu0 %v438
        %v440 = vpop.xlane.xlu0 %439
        %v441 = vrcp.pop 32.0
        %v442 = vmul.f32 %v440, %v441
        %v443 = vadd.f32 %v442, 1e-06
        %v444 = vrsqrt.pop %v443
        %v445 = vmul.f32 %v429, %v444
        %v446 = vlaneseq
        %v447 = vshrl.u32 %v446, 7
        %v448 = vsub.s32 0, %v447
        %v449 = vrot.slane %v430, %v448
        %v450 = vmul.f32 %v445, %v449
        %v451 = vpack.c.bf16 %v450, %v450
        %v452 = vld [vmem:[%s399] sm:$0xf]
        %v453 = vld [vmem:[%s399 + $0x4] sm:$0xf]
        %v454 = vld [vmem:[%s399 + $0x8] sm:$0xf]
        %v455 = vld [vmem:[%s399 + $0xc] sm:$0xf]
        %v460 = vunpack.c.l.b16 %v452
        %v461 = vunpack.c.l.b16 %v453
        %v462 = vunpack.c.l.b16 %v454
        %v463 = vunpack.c.l.b16 %v455
        %v464 = vpack.c.b16 %v461, %v460
        %v465 = vpack.c.b16 %v463, %v462
        %v469 = vsel %vm437, %v451, 0
        %471 = vmatprep.subr.bf16.mxu0 0
        %472 = vmatpush1.bf16.msra.mxu0 %v464
        %473 = vmatprep.subr.bf16.mxu0 0
        %474 = vmatpush1.bf16.msra.mxu0 %v465
        %475 = vmatprep.subr.bf16.mxu0 0
        %476 = vmatpush1.bf16.msra.mxu0 0
        %477 = vmatprep.subr.bf16.mxu0 0
        %478 = vmatpush1.bf16.msra.mxu0 0
        %479 = vmatprep.subr.bf16.mxu0 0
        %480 = vmatpush1.bf16.msra.mxu0 0
        %481 = vmatprep.subr.bf16.mxu0 0
        %482 = vmatpush1.bf16.msra.mxu0 0
        %483 = vmatprep.subr.bf16.mxu0 0
        %484 = vmatpush1.bf16.msra.mxu0 0
        %485 = vmatprep.subr.bf16.mxu0 0
        %486 = vmatpush1.bf16.msra.mxu0 0
        %487 = vmatprep.subr.bf16.mxu0 0
        %488 = vmatpush1.bf16.msra.mxu0 0
        %489 = vmatprep.subr.bf16.mxu0 0
        %490 = vmatpush1.bf16.msra.mxu0 0
        %491 = vmatprep.subr.bf16.mxu0 0
        %492 = vmatpush1.bf16.msra.mxu0 0
        %493 = vmatprep.subr.bf16.mxu0 0
        %494 = vmatpush1.bf16.msra.mxu0 0
        %495 = vmatprep.subr.bf16.mxu0 0
        %496 = vmatpush1.bf16.msra.mxu0 0
        %497 = vmatprep.subr.bf16.mxu0 0
        %498 = vmatpush1.bf16.msra.mxu0 0
        %499 = vmatprep.subr.bf16.mxu0 0
        %500 = vmatpush1.bf16.msra.mxu0 0
        %501 = vmatprep.subr.bf16.mxu0 0
        %502 = vmatpush1.bf16.msra.mxu0 0
        %503 = vmatprep.mubr.bf16.mxu0 0
        %504 = vmatmul.mubr.bf16.gmra.mrb[0].mxu0 %v469
        %v505 = vpop.f32.mrb[0].mxu0
        %v506 = vadd.f32 0.0, %v505
        %v507 = vpop.f32.mrb[0].mxu0
        %v508 = vpop.f32.mrb[0].mxu0
        %v509 = vpop.f32.mrb[0].mxu0
        %510 = vdwg.mxu0
        %512 = vrot.lane.b32.xlu0 %v506, 120
        %v513 = vpop.permute.xlu0 %512
        %515 = vrot.lane.b32.xlu0 %v506, 112
        %v516 = vpop.permute.xlu0 %515
        %518 = vrot.lane.b32.xlu0 %v506, 104
        %v519 = vpop.permute.xlu0 %518
        %v521 = vsub.f32 0.0, %v506
        %v522 = vsub.f32 0.0, %v513
        %v523 = vsub.f32 0.0, %v516
        %v524 = vsub.f32 0.0, %v519
        %529 = vrot.lane.b32.xlu0 %v521, 124
        %v530 = vpop.permute.xlu0 %529
        %531 = vrot.lane.b32.xlu0 %v522, 124
        %v532 = vpop.permute.xlu0 %531
        %533 = vrot.lane.b32.xlu0 %v523, 124
        %v534 = vpop.permute.xlu0 %533
        %535 = vrot.lane.b32.xlu0 %v524, 124
        %v536 = vpop.permute.xlu0 %535
        %541 = vrot.lane.b32.xlu0 %v506, 4
        %v542 = vpop.permute.xlu0 %541
        %543 = vrot.lane.b32.xlu0 %v513, 4
        %v544 = vpop.permute.xlu0 %543
        %545 = vrot.lane.b32.xlu0 %v516, 4
        %v546 = vpop.permute.xlu0 %545
        %547 = vrot.lane.b32.xlu0 %v519, 4
        %v548 = vpop.permute.xlu0 %547
        %vm553 = vcmask 31744
        %v554 = vsel %vm553, %v530, %v542
        %v555 = vsel %vm553, %v532, %v544
        %v556 = vsel %vm553, %v534, %v546
        %v557 = vsel %vm553, %v536, %v548
        %v558 = vmul.f32 %v506, %v431
        %v559 = vmul.f32 %v513, %v431
        %v560 = vmul.f32 %v516, %v431
        %v561 = vmul.f32 %v519, %v431
        %v562 = vmul.f32 %v554, %v433
        %v563 = vmul.f32 %v555, %v433
        %v564 = vmul.f32 %v556, %v433
        %v565 = vmul.f32 %v557, %v433
        %v566 = vadd.f32 %v558, %v562
        %v567 = vadd.f32 %v559, %v563
        %v568 = vadd.f32 %v560, %v564
        %v569 = vadd.f32 %v561, %v565
        %v570 = vmul.f32 %v566, 0.35355338
        %v571 = vmul.f32 %v567, 0.35355338
        %v572 = vmul.f32 %v568, 0.35355338
        %v573 = vmul.f32 %v569, 0.35355338
        %574 = vrot.lane.b32.xlu0 %v521, 92
        %v575 = vpop.permute.xlu0 %574
        %576 = vrot.lane.b32.xlu0 %v522, 92
        %v577 = vpop.permute.xlu0 %576
        %578 = vrot.lane.b32.xlu0 %v523, 92
        %v579 = vpop.permute.xlu0 %578
        %580 = vrot.lane.b32.xlu0 %v524, 92
        %v581 = vpop.permute.xlu0 %580
        %586 = vrot.lane.b32.xlu0 %v506, 100
        %v587 = vpop.permute.xlu0 %586
        %588 = vrot.lane.b32.xlu0 %v513, 100
        %v589 = vpop.permute.xlu0 %588
        %590 = vrot.lane.b32.xlu0 %v516, 100
        %v591 = vpop.permute.xlu0 %590
        %592 = vrot.lane.b32.xlu0 %v519, 100
        %v593 = vpop.permute.xlu0 %592
        %v598 = vsel %vm553, %v575, %v587
        %v599 = vsel %vm553, %v577, %v589
        %v600 = vsel %vm553, %v579, %v591
        %v601 = vsel %vm553, %v581, %v593
        %603 = vrot.lane.b32.xlu0 %v431, 32
        %v604 = vpop.permute.xlu0 %603
        %v606 = vmul.f32 %v506, %v604
        %v607 = vmul.f32 %v513, %v604
        %v608 = vmul.f32 %v516, %v604
        %v609 = vmul.f32 %v519, %v604
        %v610 = vmul.f32 %v598, %v433
        %v611 = vmul.f32 %v599, %v433
        %v612 = vmul.f32 %v600, %v433
        %v613 = vmul.f32 %v601, %v433
        %618 = vrot.lane.b32.xlu0 %v610, 32
        %v619 = vpop.permute.xlu0 %618
        %620 = vrot.lane.b32.xlu0 %v611, 32
        %v621 = vpop.permute.xlu0 %620
        %622 = vrot.lane.b32.xlu0 %v612, 32
        %v623 = vpop.permute.xlu0 %622
        %624 = vrot.lane.b32.xlu0 %v613, 32
        %v625 = vpop.permute.xlu0 %624
        %v630 = vadd.f32 %v606, %v619
        %v631 = vadd.f32 %v607, %v621
        %v632 = vadd.f32 %v608, %v623
        %v633 = vadd.f32 %v609, %v625
        %v634 = vpack.c.bf16 %v570, %v570
        %v635 = vpack.c.bf16 %v571, %v571
        %v636 = vpack.c.bf16 %v572, %v572
        %v637 = vpack.c.bf16 %v573, %v573
        %v638 = vpack.c.bf16 %v630, %v630
        %v639 = vpack.c.bf16 %v631, %v631
        %v640 = vpack.c.bf16 %v632, %v632
        %v641 = vpack.c.bf16 %v633, %v633
        %643 = vrot.lane.b32.xlu0 %v638, 96
        %v644 = vpop.permute.xlu0 %643
        %vm645 = vcmask 64512
        %v647 = vsel %vm645, %v634, 0
        %v650 = vsel %vm645, %v644, 0
        %652 = vmatprep.subr.bf16.mxu0 0
        %653 = vmatpush1.bf16.xpose.msra.mxu0 %v650
        %654 = vmatprep.subr.bf16.mxu0 0
        %655 = vmatpush1.bf16.xpose.msra.mxu0 0
        %656 = vmatprep.subr.bf16.mxu0 0
        %657 = vmatpush1.bf16.xpose.msra.mxu0 0
        %658 = vmatprep.subr.bf16.mxu0 0
        %659 = vmatpush1.bf16.xpose.msra.mxu0 0
        %660 = vmatprep.subr.bf16.mxu0 0
        %661 = vmatpush1.bf16.xpose.msra.mxu0 0
        %662 = vmatprep.subr.bf16.mxu0 0
        %663 = vmatpush1.bf16.xpose.msra.mxu0 0
        %664 = vmatprep.subr.bf16.mxu0 0
        %665 = vmatpush1.bf16.xpose.msra.mxu0 0
        %666 = vmatprep.subr.bf16.mxu0 0
        %667 = vmatpush1.bf16.xpose.msra.mxu0 0
        %668 = vmatprep.subr.bf16.mxu0 0
        %669 = vmatpush1.bf16.xpose.msra.mxu0 0
        %670 = vmatprep.subr.bf16.mxu0 0
        %671 = vmatpush1.bf16.xpose.msra.mxu0 0
        %672 = vmatprep.subr.bf16.mxu0 0
        %673 = vmatpush1.bf16.xpose.msra.mxu0 0
        %674 = vmatprep.subr.bf16.mxu0 0
        %675 = vmatpush1.bf16.xpose.msra.mxu0 0
        %676 = vmatprep.subr.bf16.mxu0 0
        %677 = vmatpush1.bf16.xpose.msra.mxu0 0
        %678 = vmatprep.subr.bf16.mxu0 0
        %679 = vmatpush1.bf16.xpose.msra.mxu0 0
        %680 = vmatprep.subr.bf16.mxu0 0
        %681 = vmatpush1.bf16.xpose.msra.mxu0 0
        %682 = vmatprep.subr.bf16.mxu0 0
        %683 = vmatpush1.bf16.xpose.msra.mxu0 0
        %684 = vmatprep.mubr.bf16.mxu0 0
        %685 = vmatmul.mubr.bf16.gmra.mrb[0].mxu0 %v647
        %v686 = vpop.f32.mrb[0].mxu0
        %v687 = vadd.f32 %v435, %v686
        %v688 = vpop.f32.mrb[0].mxu0
        %v689 = vpop.f32.mrb[0].mxu0
        %v690 = vpop.f32.mrb[0].mxu0
        %691 = vdwg.mxu0
        %693 = vrot.lane.b32.xlu0 %v639, 96
        %v694 = vpop.permute.xlu0 %693
        %v696 = vsel %vm645, %v635, 0
        %v699 = vsel %vm645, %v694, 0
        %701 = vmatprep.subr.bf16.mxu0 0
        %702 = vmatpush1.bf16.xpose.msra.mxu0 %v699
        %703 = vmatprep.subr.bf16.mxu0 0
        %704 = vmatpush1.bf16.xpose.msra.mxu0 0
        %705 = vmatprep.subr.bf16.mxu0 0
        %706 = vmatpush1.bf16.xpose.msra.mxu0 0
        %707 = vmatprep.subr.bf16.mxu0 0
        %708 = vmatpush1.bf16.xpose.msra.mxu0 0
        %709 = vmatprep.subr.bf16.mxu0 0
        %710 = vmatpush1.bf16.xpose.msra.mxu0 0
        %711 = vmatprep.subr.bf16.mxu0 0
        %712 = vmatpush1.bf16.xpose.msra.mxu0 0
        %713 = vmatprep.subr.bf16.mxu0 0
        %714 = vmatpush1.bf16.xpose.msra.mxu0 0
        %715 = vmatprep.subr.bf16.mxu0 0
        %716 = vmatpush1.bf16.xpose.msra.mxu0 0
        %717 = vmatprep.subr.bf16.mxu0 0
        %718 = vmatpush1.bf16.xpose.msra.mxu0 0
        %719 = vmatprep.subr.bf16.mxu0 0
        %720 = vmatpush1.bf16.xpose.msra.mxu0 0
        %721 = vmatprep.subr.bf16.mxu0 0
        %722 = vmatpush1.bf16.xpose.msra.mxu0 0
        %723 = vmatprep.subr.bf16.mxu0 0
        %724 = vmatpush1.bf16.xpose.msra.mxu0 0
        %725 = vmatprep.subr.bf16.mxu0 0
        %726 = vmatpush1.bf16.xpose.msra.mxu0 0
        %727 = vmatprep.subr.bf16.mxu0 0
        %728 = vmatpush1.bf16.xpose.msra.mxu0 0
        %729 = vmatprep.subr.bf16.mxu0 0
        %730 = vmatpush1.bf16.xpose.msra.mxu0 0
        %731 = vmatprep.subr.bf16.mxu0 0
        %732 = vmatpush1.bf16.xpose.msra.mxu0 0
        %733 = vmatprep.mubr.bf16.mxu0 0
        %734 = vmatmul.mubr.bf16.gmra.mrb[0].mxu0 %v696
        %v735 = vpop.f32.mrb[0].mxu0
        %v736 = vadd.f32 %v435, %v735
        %v737 = vpop.f32.mrb[0].mxu0
        %v738 = vpop.f32.mrb[0].mxu0
        %v739 = vpop.f32.mrb[0].mxu0
        %740 = vdwg.mxu0
        %742 = vrot.lane.b32.xlu0 %v640, 96
        %v743 = vpop.permute.xlu0 %742
        %v745 = vsel %vm645, %v636, 0
        %v748 = vsel %vm645, %v743, 0
        %750 = vmatprep.subr.bf16.mxu0 0
        %751 = vmatpush1.bf16.xpose.msra.mxu0 %v748
        %752 = vmatprep.subr.bf16.mxu0 0
        %753 = vmatpush1.bf16.xpose.msra.mxu0 0
        %754 = vmatprep.subr.bf16.mxu0 0
        %755 = vmatpush1.bf16.xpose.msra.mxu0 0
        %756 = vmatprep.subr.bf16.mxu0 0
        %757 = vmatpush1.bf16.xpose.msra.mxu0 0
        %758 = vmatprep.subr.bf16.mxu0 0
        %759 = vmatpush1.bf16.xpose.msra.mxu0 0
        %760 = vmatprep.subr.bf16.mxu0 0
        %761 = vmatpush1.bf16.xpose.msra.mxu0 0
        %762 = vmatprep.subr.bf16.mxu0 0
        %763 = vmatpush1.bf16.xpose.msra.mxu0 0
        %764 = vmatprep.subr.bf16.mxu0 0
        %765 = vmatpush1.bf16.xpose.msra.mxu0 0
        %766 = vmatprep.subr.bf16.mxu0 0
        %767 = vmatpush1.bf16.xpose.msra.mxu0 0
        %768 = vmatprep.subr.bf16.mxu0 0
        %769 = vmatpush1.bf16.xpose.msra.mxu0 0
        %770 = vmatprep.subr.bf16.mxu0 0
        %771 = vmatpush1.bf16.xpose.msra.mxu0 0
        %772 = vmatprep.subr.bf16.mxu0 0
        %773 = vmatpush1.bf16.xpose.msra.mxu0 0
        %774 = vmatprep.subr.bf16.mxu0 0
        %775 = vmatpush1.bf16.xpose.msra.mxu0 0
        %776 = vmatprep.subr.bf16.mxu0 0
        %777 = vmatpush1.bf16.xpose.msra.mxu0 0
        %778 = vmatprep.subr.bf16.mxu0 0
        %779 = vmatpush1.bf16.xpose.msra.mxu0 0
        %780 = vmatprep.subr.bf16.mxu0 0
        %781 = vmatpush1.bf16.xpose.msra.mxu0 0
        %782 = vmatprep.mubr.bf16.mxu0 0
        %783 = vmatmul.mubr.bf16.gmra.mrb[0].mxu0 %v745
        %v784 = vpop.f32.mrb[0].mxu0
        %v785 = vadd.f32 %v435, %v784
        %v786 = vpop.f32.mrb[0].mxu0
        %v787 = vpop.f32.mrb[0].mxu0
        %v788 = vpop.f32.mrb[0].mxu0
        %789 = vdwg.mxu0
        %791 = vrot.lane.b32.xlu0 %v641, 96
        %v792 = vpop.permute.xlu0 %791
        %v794 = vsel %vm645, %v637, 0
        %v797 = vsel %vm645, %v792, 0
        %799 = vmatprep.subr.bf16.mxu0 0
        %800 = vmatpush1.bf16.xpose.msra.mxu0 %v797
        %801 = vmatprep.subr.bf16.mxu0 0
        %802 = vmatpush1.bf16.xpose.msra.mxu0 0
        %803 = vmatprep.subr.bf16.mxu0 0
        %804 = vmatpush1.bf16.xpose.msra.mxu0 0
        %805 = vmatprep.subr.bf16.mxu0 0
        %806 = vmatpush1.bf16.xpose.msra.mxu0 0
        %807 = vmatprep.subr.bf16.mxu0 0
        %808 = vmatpush1.bf16.xpose.msra.mxu0 0
        %809 = vmatprep.subr.bf16.mxu0 0
        %810 = vmatpush1.bf16.xpose.msra.mxu0 0
        %811 = vmatprep.subr.bf16.mxu0 0
        %812 = vmatpush1.bf16.xpose.msra.mxu0 0
        %813 = vmatprep.subr.bf16.mxu0 0
        %814 = vmatpush1.bf16.xpose.msra.mxu0 0
        %815 = vmatprep.subr.bf16.mxu0 0
        %816 = vmatpush1.bf16.xpose.msra.mxu0 0
        %817 = vmatprep.subr.bf16.mxu0 0
        %818 = vmatpush1.bf16.xpose.msra.mxu0 0
        %819 = vmatprep.subr.bf16.mxu0 0
        %820 = vmatpush1.bf16.xpose.msra.mxu0 0
        %821 = vmatprep.subr.bf16.mxu0 0
        %822 = vmatpush1.bf16.xpose.msra.mxu0 0
        %823 = vmatprep.subr.bf16.mxu0 0
        %824 = vmatpush1.bf16.xpose.msra.mxu0 0
        %825 = vmatprep.subr.bf16.mxu0 0
        %826 = vmatpush1.bf16.xpose.msra.mxu0 0
        %827 = vmatprep.subr.bf16.mxu0 0
        %828 = vmatpush1.bf16.xpose.msra.mxu0 0
        %829 = vmatprep.subr.bf16.mxu0 0
        %830 = vmatpush1.bf16.xpose.msra.mxu0 0
        %831 = vmatprep.mubr.bf16.mxu0 0
        %832 = vmatmul.mubr.bf16.gmra.mrb[0].mxu0 %v794
        %v833 = vpop.f32.mrb[0].mxu0
        %v834 = vadd.f32 %v435, %v833
        %v835 = vpop.f32.mrb[0].mxu0
        %v836 = vpop.f32.mrb[0].mxu0
        %v837 = vpop.f32.mrb[0].mxu0
        %838 = vdwg.mxu0
        %v839 = vsel %vm645, %v687, -inf
        %840 = vmax.xlane.f32.xlu0 %v839
        %v841 = vpop.xlane.xlu0 %840
        %v842 = vsel %vm645, %v736, -inf
        %843 = vmax.xlane.f32.xlu0 %v842
        %v844 = vpop.xlane.xlu0 %843
        %v845 = vsel %vm645, %v785, -inf
        %846 = vmax.xlane.f32.xlu0 %v845
        %v847 = vpop.xlane.xlu0 %846
        %v848 = vsel %vm645, %v834, -inf
        %849 = vmax.xlane.f32.xlu0 %v848
        %v850 = vpop.xlane.xlu0 %849
        %v851 = vsub.f32 %v687, %v841
        %v852 = vsub.f32 %v736, %v844
        %v853 = vsub.f32 %v785, %v847
        %v854 = vsub.f32 %v834, %v850
        %v855 = vmul.f32 %v851, 1.442695
        %v856 = vpow.pop %v855
        %v857 = vmul.f32 %v852, 1.442695
        %v858 = vpow.pop %v857
        %v859 = vmul.f32 %v853, 1.442695
        %v860 = vpow.pop %v859
        %v861 = vmul.f32 %v854, 1.442695
        %v862 = vpow.pop %v861
        %v863 = vsel %vm645, %v856, 0.0
        %864 = vadd.xlane.f32.xlu0 %v863
        %v865 = vpop.xlane.xlu0 %864
        %v866 = vsel %vm645, %v858, 0.0
        %867 = vadd.xlane.f32.xlu0 %v866
        %v868 = vpop.xlane.xlu0 %867
        %v869 = vsel %vm645, %v860, 0.0
        %870 = vadd.xlane.f32.xlu0 %v869
        %v871 = vpop.xlane.xlu0 %870
        %v872 = vsel %vm645, %v862, 0.0
        %873 = vadd.xlane.f32.xlu0 %v872
        %v874 = vpop.xlane.xlu0 %873
        %v875 = vrcp.pop %v865
        %v876 = vmul.f32 %v856, %v875
        %v877 = vrcp.pop %v868
        %v878 = vmul.f32 %v858, %v877
        %v879 = vrcp.pop %v871
        %v880 = vmul.f32 %v860, %v879
        %v881 = vrcp.pop %v874
        %v882 = vmul.f32 %v862, %v881
        %v883 = vpack.c.bf16 %v876, %v876
        %v884 = vpack.c.bf16 %v878, %v878
        %v885 = vpack.c.bf16 %v880, %v880
        %v886 = vpack.c.bf16 %v882, %v882
        %v887 = vpack.c.bf16 %v506, %v506
        %v888 = vpack.c.bf16 %v513, %v513
        %v889 = vpack.c.bf16 %v516, %v516
        %v890 = vpack.c.bf16 %v519, %v519
        %892 = vrot.lane.b32.xlu0 %v887, 64
        %v893 = vpop.permute.xlu0 %892
        %v895 = vsel %vm645, %v883, 0
        %vm897 = vcmask 1043456
        %v899 = vsel %vm897, %v893, 0
        %901 = vmatprep.subr.bf16.mxu0 0
        %902 = vmatpush1.bf16.msra.mxu0 %v899
        %903 = vmatprep.subr.bf16.mxu0 0
        %904 = vmatpush1.bf16.msra.mxu0 0
        %905 = vmatprep.subr.bf16.mxu0 0
        %906 = vmatpush1.bf16.msra.mxu0 0
        %907 = vmatprep.subr.bf16.mxu0 0
        %908 = vmatpush1.bf16.msra.mxu0 0
        %909 = vmatprep.subr.bf16.mxu0 0
        %910 = vmatpush1.bf16.msra.mxu0 0
        %911 = vmatprep.subr.bf16.mxu0 0
        %912 = vmatpush1.bf16.msra.mxu0 0
        %913 = vmatprep.subr.bf16.mxu0 0
        %914 = vmatpush1.bf16.msra.mxu0 0
        %915 = vmatprep.subr.bf16.mxu0 0
        %916 = vmatpush1.bf16.msra.mxu0 0
        %917 = vmatprep.subr.bf16.mxu0 0
        %918 = vmatpush1.bf16.msra.mxu0 0
        %919 = vmatprep.subr.bf16.mxu0 0
        %920 = vmatpush1.bf16.msra.mxu0 0
        %921 = vmatprep.subr.bf16.mxu0 0
        %922 = vmatpush1.bf16.msra.mxu0 0
        %923 = vmatprep.subr.bf16.mxu0 0
        %924 = vmatpush1.bf16.msra.mxu0 0
        %925 = vmatprep.subr.bf16.mxu0 0
        %926 = vmatpush1.bf16.msra.mxu0 0
        %927 = vmatprep.subr.bf16.mxu0 0
        %928 = vmatpush1.bf16.msra.mxu0 0
        %929 = vmatprep.subr.bf16.mxu0 0
        %930 = vmatpush1.bf16.msra.mxu0 0
        %931 = vmatprep.subr.bf16.mxu0 0
        %932 = vmatpush1.bf16.msra.mxu0 0
        %933 = vmatprep.mubr.bf16.mxu0 0
        %934 = vmatmul.mubr.bf16.gmra.mrb[0].mxu0 %v895
        %v935 = vpop.f32.mrb[0].mxu0
        %v936 = vadd.f32 0.0, %v935
        %v937 = vpop.f32.mrb[0].mxu0
        %v938 = vpop.f32.mrb[0].mxu0
        %v939 = vpop.f32.mrb[0].mxu0
        %940 = vdwg.mxu0
        %942 = vrot.lane.b32.xlu0 %v888, 64
        %v943 = vpop.permute.xlu0 %942
        %v945 = vsel %vm645, %v884, 0
        %v948 = vsel %vm897, %v943, 0
        %950 = vmatprep.subr.bf16.mxu0 0
        %951 = vmatpush1.bf16.msra.mxu0 %v948
        %952 = vmatprep.subr.bf16.mxu0 0
        %953 = vmatpush1.bf16.msra.mxu0 0
        %954 = vmatprep.subr.bf16.mxu0 0
        %955 = vmatpush1.bf16.msra.mxu0 0
        %956 = vmatprep.subr.bf16.mxu0 0
        %957 = vmatpush1.bf16.msra.mxu0 0
        %958 = vmatprep.subr.bf16.mxu0 0
        %959 = vmatpush1.bf16.msra.mxu0 0
        %960 = vmatprep.subr.bf16.mxu0 0
        %961 = vmatpush1.bf16.msra.mxu0 0
        %962 = vmatprep.subr.bf16.mxu0 0
        %963 = vmatpush1.bf16.msra.mxu0 0
        %964 = vmatprep.subr.bf16.mxu0 0
        %965 = vmatpush1.bf16.msra.mxu0 0
        %966 = vmatprep.subr.bf16.mxu0 0
        %967 = vmatpush1.bf16.msra.mxu0 0
        %968 = vmatprep.subr.bf16.mxu0 0
        %969 = vmatpush1.bf16.msra.mxu0 0
        %970 = vmatprep.subr.bf16.mxu0 0
        %971 = vmatpush1.bf16.msra.mxu0 0
        %972 = vmatprep.subr.bf16.mxu0 0
        %973 = vmatpush1.bf16.msra.mxu0 0
        %974 = vmatprep.subr.bf16.mxu0 0
        %975 = vmatpush1.bf16.msra.mxu0 0
        %976 = vmatprep.subr.bf16.mxu0 0
        %977 = vmatpush1.bf16.msra.mxu0 0
        %978 = vmatprep.subr.bf16.mxu0 0
        %979 = vmatpush1.bf16.msra.mxu0 0
        %980 = vmatprep.subr.bf16.mxu0 0
        %981 = vmatpush1.bf16.msra.mxu0 0
        %982 = vmatprep.mubr.bf16.mxu0 0
        %983 = vmatmul.mubr.bf16.gmra.mrb[0].mxu0 %v945
        %v984 = vpop.f32.mrb[0].mxu0
        %v985 = vadd.f32 0.0, %v984
        %v986 = vpop.f32.mrb[0].mxu0
        %v987 = vpop.f32.mrb[0].mxu0
        %v988 = vpop.f32.mrb[0].mxu0
        %989 = vdwg.mxu0
        %991 = vrot.lane.b32.xlu0 %v889, 64
        %v992 = vpop.permute.xlu0 %991
        %v994 = vsel %vm645, %v885, 0
        %v997 = vsel %vm897, %v992, 0
        %999 = vmatprep.subr.bf16.mxu0 0
        %1000 = vmatpush1.bf16.msra.mxu0 %v997
        %1001 = vmatprep.subr.bf16.mxu0 0
        %1002 = vmatpush1.bf16.msra.mxu0 0
        %1003 = vmatprep.subr.bf16.mxu0 0
        %1004 = vmatpush1.bf16.msra.mxu0 0
        %1005 = vmatprep.subr.bf16.mxu0 0
        %1006 = vmatpush1.bf16.msra.mxu0 0
        %1007 = vmatprep.subr.bf16.mxu0 0
        %1008 = vmatpush1.bf16.msra.mxu0 0
        %1009 = vmatprep.subr.bf16.mxu0 0
        %1010 = vmatpush1.bf16.msra.mxu0 0
        %1011 = vmatprep.subr.bf16.mxu0 0
        %1012 = vmatpush1.bf16.msra.mxu0 0
        %1013 = vmatprep.subr.bf16.mxu0 0
        %1014 = vmatpush1.bf16.msra.mxu0 0
        %1015 = vmatprep.subr.bf16.mxu0 0
        %1016 = vmatpush1.bf16.msra.mxu0 0
        %1017 = vmatprep.subr.bf16.mxu0 0
        %1018 = vmatpush1.bf16.msra.mxu0 0
        %1019 = vmatprep.subr.bf16.mxu0 0
        %1020 = vmatpush1.bf16.msra.mxu0 0
        %1021 = vmatprep.subr.bf16.mxu0 0
        %1022 = vmatpush1.bf16.msra.mxu0 0
        %1023 = vmatprep.subr.bf16.mxu0 0
        %1024 = vmatpush1.bf16.msra.mxu0 0
        %1025 = vmatprep.subr.bf16.mxu0 0
        %1026 = vmatpush1.bf16.msra.mxu0 0
        %1027 = vmatprep.subr.bf16.mxu0 0
        %1028 = vmatpush1.bf16.msra.mxu0 0
        %1029 = vmatprep.subr.bf16.mxu0 0
        %1030 = vmatpush1.bf16.msra.mxu0 0
        %1031 = vmatprep.mubr.bf16.mxu0 0
        %1032 = vmatmul.mubr.bf16.gmra.mrb[0].mxu0 %v994
        %v1033 = vpop.f32.mrb[0].mxu0
        %v1034 = vadd.f32 0.0, %v1033
        %v1035 = vpop.f32.mrb[0].mxu0
        %v1036 = vpop.f32.mrb[0].mxu0
        %v1037 = vpop.f32.mrb[0].mxu0
        %1038 = vdwg.mxu0
        %1040 = vrot.lane.b32.xlu0 %v890, 64
        %v1041 = vpop.permute.xlu0 %1040
        %v1043 = vsel %vm645, %v886, 0
        %v1046 = vsel %vm897, %v1041, 0
        %1048 = vmatprep.subr.bf16.mxu0 0
        %1049 = vmatpush1.bf16.msra.mxu0 %v1046
        %1050 = vmatprep.subr.bf16.mxu0 0
        %1051 = vmatpush1.bf16.msra.mxu0 0
        %1052 = vmatprep.subr.bf16.mxu0 0
        %1053 = vmatpush1.bf16.msra.mxu0 0
        %1054 = vmatprep.subr.bf16.mxu0 0
        %1055 = vmatpush1.bf16.msra.mxu0 0
        %1056 = vmatprep.subr.bf16.mxu0 0
        %1057 = vmatpush1.bf16.msra.mxu0 0
        %1058 = vmatprep.subr.bf16.mxu0 0
        %1059 = vmatpush1.bf16.msra.mxu0 0
        %1060 = vmatprep.subr.bf16.mxu0 0
        %1061 = vmatpush1.bf16.msra.mxu0 0
        %1062 = vmatprep.subr.bf16.mxu0 0
        %1063 = vmatpush1.bf16.msra.mxu0 0
        %1064 = vmatprep.subr.bf16.mxu0 0
        %1065 = vmatpush1.bf16.msra.mxu0 0
        %1066 = vmatprep.subr.bf16.mxu0 0
        %1067 = vmatpush1.bf16.msra.mxu0 0
        %1068 = vmatprep.subr.bf16.mxu0 0
        %1069 = vmatpush1.bf16.msra.mxu0 0
        %1070 = vmatprep.subr.bf16.mxu0 0
        %1071 = vmatpush1.bf16.msra.mxu0 0
        %1072 = vmatprep.subr.bf16.mxu0 0
        %1073 = vmatpush1.bf16.msra.mxu0 0
        %1074 = vmatprep.subr.bf16.mxu0 0
        %1075 = vmatpush1.bf16.msra.mxu0 0
        %1076 = vmatprep.subr.bf16.mxu0 0
        %1077 = vmatpush1.bf16.msra.mxu0 0
        %1078 = vmatprep.subr.bf16.mxu0 0
        %1079 = vmatpush1.bf16.msra.mxu0 0
        %1080 = vmatprep.mubr.bf16.mxu0 0
        %1081 = vmatmul.mubr.bf16.gmra.mrb[0].mxu0 %v1043
        %v1082 = vpop.f32.mrb[0].mxu0
        %v1083 = vadd.f32 0.0, %v1082
        %v1084 = vpop.f32.mrb[0].mxu0
        %v1085 = vpop.f32.mrb[0].mxu0
        %v1086 = vpop.f32.mrb[0].mxu0
        %1087 = vdwg.mxu0
        %1089 = vrot.lane.b32.xlu0 %v985, 8
        %v1090 = vpop.permute.xlu0 %1089
        %1093 = vrot.lane.b32.xlu0 %v1034, 16
        %v1094 = vpop.permute.xlu0 %1093
        %1097 = vrot.lane.b32.xlu0 %v1083, 24
        %v1098 = vpop.permute.xlu0 %1097
        %v1100 = vsel %vm645, %v936, %v1090
        %vm1101 = vcmask 130048
        %v1102 = vsel %vm1101, %v1100, %v1094
        %vm1103 = vcmask 195584
        %v1104 = vsel %vm1103, %v1102, %v1098
        %v1105 = vld [vmem:[%s404] sm:$0xf]
        %v1106 = vld [vmem:[%s404 + $0x4] sm:$0xf]
        %v1107 = vld [vmem:[%s404 + $0x8] sm:$0xf]
        %v1108 = vld [vmem:[%s404 + $0xc] sm:$0xf]
        %v1109 = vpack.c.bf16 %v1104, %v1104
        %v1114 = vunpack.c.l.b16 %v1105
        %v1115 = vunpack.c.l.b16 %v1106
        %v1116 = vunpack.c.l.b16 %v1107
        %v1117 = vunpack.c.l.b16 %v1108
        %v1118 = vpack.c.b16 %v1115, %v1114
        %v1119 = vpack.c.b16 %v1117, %v1116
        %v1123 = vsel %vm437, %v1109, 0
        %1125 = vmatprep.subr.bf16.mxu0 0
        %1126 = vmatpush1.bf16.msra.mxu0 %v1118
        %1127 = vmatprep.subr.bf16.mxu0 0
        %1128 = vmatpush1.bf16.msra.mxu0 %v1119
        %1129 = vmatprep.subr.bf16.mxu0 0
        %1130 = vmatpush1.bf16.msra.mxu0 0
        %1131 = vmatprep.subr.bf16.mxu0 0
        %1132 = vmatpush1.bf16.msra.mxu0 0
        %1133 = vmatprep.subr.bf16.mxu0 0
        %1134 = vmatpush1.bf16.msra.mxu0 0
        %1135 = vmatprep.subr.bf16.mxu0 0
        %1136 = vmatpush1.bf16.msra.mxu0 0
        %1137 = vmatprep.subr.bf16.mxu0 0
        %1138 = vmatpush1.bf16.msra.mxu0 0
        %1139 = vmatprep.subr.bf16.mxu0 0
        %1140 = vmatpush1.bf16.msra.mxu0 0
        %1141 = vmatprep.subr.bf16.mxu0 0
        %1142 = vmatpush1.bf16.msra.mxu0 0
        %1143 = vmatprep.subr.bf16.mxu0 0
        %1144 = vmatpush1.bf16.msra.mxu0 0
        %1145 = vmatprep.subr.bf16.mxu0 0
        %1146 = vmatpush1.bf16.msra.mxu0 0
        %1147 = vmatprep.subr.bf16.mxu0 0
        %1148 = vmatpush1.bf16.msra.mxu0 0
        %1149 = vmatprep.subr.bf16.mxu0 0
        %1150 = vmatpush1.bf16.msra.mxu0 0
        %1151 = vmatprep.subr.bf16.mxu0 0
        %1152 = vmatpush1.bf16.msra.mxu0 0
        %1153 = vmatprep.subr.bf16.mxu0 0
        %1154 = vmatpush1.bf16.msra.mxu0 0
        %1155 = vmatprep.subr.bf16.mxu0 0
        %1156 = vmatpush1.bf16.msra.mxu0 0
        %1157 = vmatprep.mubr.bf16.mxu0 0
        %1158 = vmatmul.mubr.bf16.gmra.mrb[0].mxu0 %v1123
        %v1159 = vpop.f32.mrb[0].mxu0
        %v1160 = vadd.f32 0.0, %v1159
        %v1161 = vpop.f32.mrb[0].mxu0
        %v1162 = vpop.f32.mrb[0].mxu0
        %v1163 = vpop.f32.mrb[0].mxu0
        %1164 = vdwg.mxu0
        %v1165 = vadd.f32 %v429, %v1160
        %v1166 = vmul.f32 %v1165, %v1165
        %v1167 = vsel %vm437, %v1166, 0.0
        %1168 = vadd.xlane.f32.xlu0 %v1167
        %v1169 = vpop.xlane.xlu0 %1168
        %v1170 = vmul.f32 %v1169, %v441
        %v1171 = vadd.f32 %v1170, 1e-06
        %v1172 = vrsqrt.pop %v1171
        %v1173 = vmul.f32 %v1165, %v1172
        %v1174 = vlaneseq
        %v1175 = vshrl.u32 %v1174, 7
        %v1176 = vsub.s32 1, %v1175
        %v1177 = vrot.slane %v430, %v1176
        %v1178 = vmul.f32 %v1173, %v1177
        %v1179 = vpack.c.bf16 %v1178, %v1178
        %v1180 = vld [vmem:[%s409] sm:$0xf]
        %v1181 = vld [vmem:[%s409 + $0x4] sm:$0xf]
        %v1182 = vld [vmem:[%s409 + $0x8] sm:$0xf]
        %v1183 = vld [vmem:[%s409 + $0xc] sm:$0xf]
        %v1188 = vunpack.c.l.b16 %v1180
        %v1189 = vunpack.c.l.b16 %v1181
        %v1190 = vunpack.c.l.b16 %v1182
        %v1191 = vunpack.c.l.b16 %v1183
        %v1192 = vpack.c.b16 %v1189, %v1188
        %v1193 = vpack.c.b16 %v1191, %v1190
        %v1197 = vsel %vm437, %v1179, 0
        %1199 = vmatprep.subr.bf16.mxu0 0
        %1200 = vmatpush1.bf16.msra.mxu0 %v1192
        %1201 = vmatprep.subr.bf16.mxu0 0
        %1202 = vmatpush1.bf16.msra.mxu0 %v1193
        %1203 = vmatprep.subr.bf16.mxu0 0
        %1204 = vmatpush1.bf16.msra.mxu0 0
        %1205 = vmatprep.subr.bf16.mxu0 0
        %1206 = vmatpush1.bf16.msra.mxu0 0
        %1207 = vmatprep.subr.bf16.mxu0 0
        %1208 = vmatpush1.bf16.msra.mxu0 0
        %1209 = vmatprep.subr.bf16.mxu0 0
        %1210 = vmatpush1.bf16.msra.mxu0 0
        %1211 = vmatprep.subr.bf16.mxu0 0
        %1212 = vmatpush1.bf16.msra.mxu0 0
        %1213 = vmatprep.subr.bf16.mxu0 0
        %1214 = vmatpush1.bf16.msra.mxu0 0
        %1215 = vmatprep.subr.bf16.mxu0 0
        %1216 = vmatpush1.bf16.msra.mxu0 0
        %1217 = vmatprep.subr.bf16.mxu0 0
        %1218 = vmatpush1.bf16.msra.mxu0 0
        %1219 = vmatprep.subr.bf16.mxu0 0
        %1220 = vmatpush1.bf16.msra.mxu0 0
        %1221 = vmatprep.subr.bf16.mxu0 0
        %1222 = vmatpush1.bf16.msra.mxu0 0
        %1223 = vmatprep.subr.bf16.mxu0 0
        %1224 = vmatpush1.bf16.msra.mxu0 0
        %1225 = vmatprep.subr.bf16.mxu0 0
        %1226 = vmatpush1.bf16.msra.mxu0 0
        %1227 = vmatprep.subr.bf16.mxu0 0
        %1228 = vmatpush1.bf16.msra.mxu0 0
        %1229 = vmatprep.subr.bf16.mxu0 0
        %1230 = vmatpush1.bf16.msra.mxu0 0
        %1231 = vmatprep.mubr.bf16.mxu0 0
        %1232 = vmatmul.mubr.bf16.gmra.mrb[0].mxu0 %v1197
        %v1233 = vpop.f32.mrb[0].mxu0
        %v1234 = vadd.f32 0.0, %v1233
        %v1235 = vpop.f32.mrb[0].mxu0
        %v1236 = vpop.f32.mrb[0].mxu0
        %v1237 = vpop.f32.mrb[0].mxu0
        %1238 = vdwg.mxu0
        %v1239 = vxor.u32 %v1234, 2147483648
        %v1240 = vmul.f32 %v1239, 1.442695
        %v1241 = vpow.pop %v1240
        %v1242 = vadd.f32 %v1241, 1.0
        %v1243 = vrcp.pop %v1242
        %v1244 = vmul.f32 1.0, %v1243
        %v1245 = vmul.f32 %v1234, %v1244
        %1247 = vrot.lane.b32.xlu0 %v1234, 64
        %v1248 = vpop.permute.xlu0 %1247
        %v1250 = vmul.f32 %v1245, %v1248
        %v1251 = vld [vmem:[%s414] sm:$0xf]
        %v1252 = vld [vmem:[%s414 + $0x4] sm:$0xf]
        %v1253 = vld [vmem:[%s414 + $0x8] sm:$0xf]
        %v1254 = vld [vmem:[%s414 + $0xc] sm:$0xf]
        %v1255 = vld [vmem:[%s414 + $0x10] sm:$0xf]
        %v1256 = vld [vmem:[%s414 + $0x14] sm:$0xf]
        %v1257 = vld [vmem:[%s414 + $0x18] sm:$0xf]
        %v1258 = vld [vmem:[%s414 + $0x1c] sm:$0xf]
        %v1259 = vpack.c.bf16 %v1250, %v1250
        %v1268 = vunpack.c.l.b16 %v1251
        %v1269 = vunpack.c.l.b16 %v1252
        %v1270 = vunpack.c.l.b16 %v1253
        %v1271 = vunpack.c.l.b16 %v1254
        %v1272 = vunpack.c.l.b16 %v1255
        %v1273 = vunpack.c.l.b16 %v1256
        %v1274 = vunpack.c.l.b16 %v1257
        %v1275 = vunpack.c.l.b16 %v1258
        %v1276 = vpack.c.b16 %v1269, %v1268
        %v1277 = vpack.c.b16 %v1271, %v1270
        %v1278 = vpack.c.b16 %v1273, %v1272
        %v1279 = vpack.c.b16 %v1275, %v1274
        %vm1284 = vcmask 523264
        %v1286 = vsel %vm1284, %v1259, 0
        %1288 = vmatprep.subr.bf16.mxu0 0
        %1289 = vmatpush1.bf16.msra.mxu0 %v1276
        %1290 = vmatprep.subr.bf16.mxu0 0
        %1291 = vmatpush1.bf16.msra.mxu0 %v1277
        %1292 = vmatprep.subr.bf16.mxu0 0
        %1293 = vmatpush1.bf16.msra.mxu0 %v1278
        %1294 = vmatprep.subr.bf16.mxu0 0
        %1295 = vmatpush1.bf16.msra.mxu0 %v1279
        %1296 = vmatprep.subr.bf16.mxu0 0
        %1297 = vmatpush1.bf16.msra.mxu0 0
        %1298 = vmatprep.subr.bf16.mxu0 0
        %1299 = vmatpush1.bf16.msra.mxu0 0
        %1300 = vmatprep.subr.bf16.mxu0 0
        %1301 = vmatpush1.bf16.msra.mxu0 0
        %1302 = vmatprep.subr.bf16.mxu0 0
        %1303 = vmatpush1.bf16.msra.mxu0 0
        %1304 = vmatprep.subr.bf16.mxu0 0
        %1305 = vmatpush1.bf16.msra.mxu0 0
        %1306 = vmatprep.subr.bf16.mxu0 0
        %1307 = vmatpush1.bf16.msra.mxu0 0
        %1308 = vmatprep.subr.bf16.mxu0 0
        %1309 = vmatpush1.bf16.msra.mxu0 0
        %1310 = vmatprep.subr.bf16.mxu0 0
        %1311 = vmatpush1.bf16.msra.mxu0 0
        %1312 = vmatprep.subr.bf16.mxu0 0
        %1313 = vmatpush1.bf16.msra.mxu0 0
        %1314 = vmatprep.subr.bf16.mxu0 0
        %1315 = vmatpush1.bf16.msra.mxu0 0
        %1316 = vmatprep.subr.bf16.mxu0 0
        %1317 = vmatpush1.bf16.msra.mxu0 0
        %1318 = vmatprep.subr.bf16.mxu0 0
        %1319 = vmatpush1.bf16.msra.mxu0 0
        %1320 = vmatprep.mubr.bf16.mxu0 0
        %1321 = vmatmul.mubr.bf16.gmra.mrb[0].mxu0 %v1286
        %v1322 = vpop.f32.mrb[0].mxu0
        %v1323 = vadd.f32 0.0, %v1322
        %v1324 = vpop.f32.mrb[0].mxu0
        %v1325 = vpop.f32.mrb[0].mxu0
        %v1326 = vpop.f32.mrb[0].mxu0
        %1327 = vdwg.mxu0
        %v1328 = vadd.f32 %v1165, %v1323
        %1329 = vst.msk [vmem:[%s428] sm:$0xff] %vm437, %v1328
        %p1330 = scmp.eq.s32.totalorder %s32, 1
        // Predicated region
        $region61: #{e5_mistral_forward.1} parent=55 // pred_check
          %p1331 = pneg %p1330
        $region62: #{e5_mistral_forward.1} parent=55 // pred_check_branch
          %1333 = sbr.rel (%p1331) target = $region64
        $region63: #{e5_mistral_forward.1} parent=55 // pred_region
          %s1334 = sadd.s32 %s416, %s427
          %s1335 = scalar_lea.vmem [#allocation2], %s1334
          %v1336 = vld [vmem:[%s1335] sm:$0x1]
          %v1337 = vld [vmem:[%s4] sm:$0x1]
          %v1338 = vmul.f32 %v1336, %v1336
          %vm1339 = vcmask 253952
          %v1340 = vsel %vm1339, %v1338, 0.0
          %1341 = vadd.xlane.f32.xlu0 %v1340
          %v1342 = vpop.xlane.xlu0 %1341
          %v1343 = vmul.f32 %v1342, %v441
          %v1344 = vadd.f32 %v1343, 1e-06
          %v1345 = vrsqrt.pop %v1344
          %v1346 = vmul.f32 %v1336, %v1345
          %v1347 = vmul.f32 %v1346, %v1337
          %v1348 = vmul.f32 %v1347, %v1347
          %v1349 = vsel %vm1339, %v1348, 0.0
          %1350 = vadd.xlane.f32.xlu0 %v1349
          %v1351 = vpop.xlane.xlu0 %1350
          %v1352 = vmax.f32 %v1351, 1e-24
          %v1353 = vrsqrt.pop %v1352
          %v1354 = vmul.f32 %v1347, %v1353
          %s1355 = scalar_lea.vmem [#allocation5], %s33
          %1356 = vst.msk [vmem:[%s1355] sm:$0x1] %vm1339, %v1354
        $region64: #{e5_mistral_forward.1} parent=55 // pred_fallthru
          _
        // Predicated region
        $region65: #{e5_mistral_forward.1} parent=55 // pred_check
          %p1357 = pneg %p267
        $region66: #{e5_mistral_forward.1} parent=55 // pred_check_branch
          %1359 = sbr.rel (%p1357) target = $region68
        $region67: #{e5_mistral_forward.1} parent=55 // pred_region
          %s1361 = ssub.s32 32, 32
          %1362 = vsyncadd [#allocation6], %s1361
          %s1364 = sshll.u32 [#allocation5], 4
          %s1365 = int_to_ptr.vmem [resolvable:$true] %s1364
          %1367 = dma.vmem_to_hbm [thread:$0]  %s1365, 32, %s10, [#allocation6]
        $region68: #{e5_mistral_forward.1} parent=55 // pred_fallthru
          _
        // Predicated region
        $region69: #{e5_mistral_forward.1} parent=55 // pred_check
          %p1368 = pneg %p267
        $region70: #{e5_mistral_forward.1} parent=55 // pred_check_branch
          %1370 = sbr.rel (%p1368) target = $region72
        $region71: #{e5_mistral_forward.1} parent=55 // pred_region
          %1371 = dma.done [#allocation6], 32
        $region72: #{e5_mistral_forward.1} parent=55 // pred_fallthru
          _
      $region56: #{e5_mistral_forward.1} parent=5 // pred_fallthru
        _
      %p1372 = scmp.le.s32.totalorder 2, %s23
      // Predicated region
      $region73: #{e5_mistral_forward.1} parent=5 // pred_check
        %p1373 = pneg %p1372
      $region74: #{e5_mistral_forward.1} parent=5 // pred_check_branch
        %1375 = sbr.rel (%p1373) target = $region76
      $region75: #{e5_mistral_forward.1} parent=5 // pred_region
        %s1376 = ssub.s32 %s23, 2
      $region76: #{e5_mistral_forward.1} parent=5 // pred_fallthru
        _
    $region6: #{e5_mistral_forward.1} parent=1 // loop_footer
      %s27 = sadd.s32 1, %s23
    $region7: #{e5_mistral_forward.1} parent=1 // loop_footer_branch
      %22 = sbr.rel target = $region3
    $region8: #{e5_mistral_forward.1} parent=1 // loop_exit
      _
    %1377 = vsyncpa [#allocation6], 1
    %s1378 = scalar_lea.sflag [#allocation6], 1
    %1379 = vsyncpa %s1378, 1

</llo_original>
